<compile_context>
chip_gen: v7x
topology: tpu7x:2x2x1
jax: 0.10.0
libtpu: 0.0.40
codegen_flags: <defaults>
</compile_context>

<pallas_src>
import functools

import jax
import jax.numpy as jnp
from jax.experimental import pallas as pl
from jax.experimental.pallas import tpu as pltpu


def _round_up(x, m):
    return ((x + m - 1) // m) * m


def _vmem_capacity_bytes():
    try:
        return int(pltpu.get_tpu_info().vmem_capacity_bytes)
    except Exception:
        return 64 * 1024 * 1024  # conservative fallback (v7x per-core VMEM)


def _pick_tile_n(N, D, B_pad, neg_bytes, tile_n=None):
    """Pick the negatives tile width (multiple of 128 lanes)."""
    n_cols_max = _round_up(N, 128)
    if tile_n is not None:
        tn = max(128, _round_up(int(tile_n), 128))
        return min(tn, n_cols_max)
    vmem_cap = _vmem_capacity_bytes()
    # ~40 MiB of buffers on v7x (64 MiB VMEM), capped at 96 MiB on v5e/v6e.
    budget = min(int(vmem_cap * 0.65), 96 * 1024 * 1024)
    fixed = 2 * B_pad * D * 4 + (2 << 20)        # resident p_hat (x2) + headroom
    per_col = 2 * D * neg_bytes                  # double-buffered negatives stream
    per_col += 2 * D * 4                         # in-kernel f32 upcast/square temps
    per_col += 4 * B_pad * 4                     # a2n out tiles (x2) + s temporaries
    tn = (budget - fixed) // per_col
    tn = min(tn, (8 << 20) // max(D * neg_bytes, 1))   # ~8 MiB per streamed tile
    tn = max(128, (tn // 128) * 128)
    return int(min(tn, n_cols_max))


def _pirl_kernel(p_hat_ref, n_ref, a2n_ref, m_ref, l_ref, *,
                 num_negatives, tile_n, tiles_per_split):
    eps = 1e-8
    j = pl.program_id(1)
    c = pl.program_id(0) * tiles_per_split + j   # global (unclamped) tile index

    # Per-split online-logsumexp state lives in the resident (B_pad, 1) output
    # blocks (constant block index along the streamed axis).
    @pl.when(j == 0)
    def _init():
        m_ref[...] = jnp.full_like(m_ref, -jnp.inf)
        l_ref[...] = jnp.zeros_like(l_ref)

    p_hat = p_hat_ref[...]                       # (B_pad, D) f32, 1/||p|| and 1/T folded
    n = n_ref[...]                               # (tn, D), streamed HBM dtype

    # ||n||^2 via a skinny MXU contraction (no XLU lane-reduce over (tn, D)).
    n32 = n.astype(jnp.float32)
    nsq = n32 * n32
    ones = jnp.ones((8, nsq.shape[1]), jnp.float32)
    n_sq = jax.lax.dot_general(
        ones, nsq,
        dimension_numbers=(((1,), (1,)), ((), ())),
        precision=jax.lax.Precision.HIGHEST,
        preferred_element_type=jnp.float32)      # (8, tn), rows identical
    inv_n = jax.lax.rsqrt(jnp.maximum(n_sq[0:1, :], eps))   # (1, tn) ~ 1/||n||

    # Raw similarities: contract on D and rescale the small (B, tn) result
    # instead of normalizing the big (tn, D) operand.
    if n.dtype == jnp.float32:
        mm_prec = jax.lax.Precision.HIGHEST
    else:
        mm_prec = jax.lax.Precision.DEFAULT
    s_raw = jax.lax.dot_general(
        p_hat.astype(n.dtype), n,
        dimension_numbers=(((1,), (1,)), ((), ())),
        precision=mm_prec,
        preferred_element_type=jnp.float32)      # (B_pad, tn)
    s = s_raw * inv_n                            # cos/T logits

    a2n_ref[...] = s                             # lane-dense logits tile

    def _lse_update(vals):
        m_prev = m_ref[...]
        m_new = jnp.maximum(m_prev, jnp.max(vals, axis=1, keepdims=True))
        alpha = jnp.exp(m_prev - m_new)
        l_ref[...] = alpha * l_ref[...] + jnp.sum(jnp.exp(vals - m_new),
                                                  axis=1, keepdims=True)
        m_ref[...] = m_new

    # Column masking is only needed on tiles that reach past the last real
    # negative (ragged boundary tile or clamped duplicate tiles).
    tile_end = (c + 1) * tile_n

    @pl.when(tile_end <= num_negatives)
    def _interior():
        _lse_update(s)

    @pl.when(tile_end > num_negatives)
    def _boundary():
        col = jax.lax.broadcasted_iota(jnp.int32, s.shape, 1) + c * tile_n
        _lse_update(jnp.where(col < num_negatives, s, -jnp.inf))


def pirl_loss(anchors, positives, negatives, temperature=0.07, tile_n=None):
    """PIRL loss forward; returns (loss, logits) like the PyTorch module."""
    assert anchors.shape == positives.shape
    B, D = anchors.shape
    N, D2 = negatives.shape
    assert D == D2

    eps = 1e-8
    inv_t = 1.0 / float(temperature)

    a32 = anchors.astype(jnp.float32)
    p32 = positives.astype(jnp.float32)
    # Stream negatives in their input dtype (bf16 is supported and halves HBM).
    if negatives.dtype not in (jnp.dtype(jnp.bfloat16), jnp.dtype(jnp.float32)):
        negatives = negatives.astype(jnp.float32)

    # O(B*D) prologue in plain JAX: positive logit + folded p_hat = p/||p||/T.
    a_sq = jnp.sum(a32 * a32, axis=1, keepdims=True)
    p_sq = jnp.sum(p32 * p32, axis=1, keepdims=True)
    ap = jnp.sum(a32 * p32, axis=1, keepdims=True)
    pos_logit = ap / jnp.maximum(jnp.sqrt(a_sq) * jnp.sqrt(p_sq), eps) * inv_t  # (B,1)
    # NOTE: the kernel clamps ||p|| and ||n|| individually (torch clamps the
    # product at 1e-8); identical for non-degenerate inputs.
    p_hat = p32 * (jax.lax.rsqrt(jnp.maximum(p_sq, eps)) * inv_t)               # (B,D)

    # Sublane-align the batch; padded rows are dropped in the epilogue.
    B_pad = _round_up(max(B, 1), 8)
    if B_pad != B:
        p_hat = jnp.pad(p_hat, ((0, B_pad - B), (0, 0)))

    neg_bytes = negatives.dtype.itemsize
    tn = _pick_tile_n(N, D, B_pad, neg_bytes, tile_n)
    n_tiles = pl.cdiv(N, tn)
    last_block = n_tiles - 1

    # Split the streamed axis over two TensorCores when there is enough work
    # (grid axis 0 is 'parallel').  Odd tile counts cost one clamped, fully
    # masked duplicate tile on the second split (harmless: identical a2n
    # values, zero logsumexp contribution).
    num_splits = 2 if n_tiles >= 2 else 1
    per_split = pl.cdiv(n_tiles, num_splits)

    kernel = functools.partial(
        _pirl_kernel, num_negatives=N, tile_n=tn, tiles_per_split=per_split)

    footprint = (2 * B_pad * D * 4
                 + tn * (2 * D * neg_bytes + 2 * D * 4 + 4 * B_pad * 4)
                 + (2 << 20))
    vmem_cap = _vmem_capacity_bytes()
    vmem_limit = int(min(max(footprint + (8 << 20), 32 << 20),
                         int(vmem_cap * 0.92)))

    grid_spec = pltpu.PrefetchScalarGridSpec(
        num_scalar_prefetch=0,
        grid=(num_splits, per_split),
        in_specs=[
            # p_hat: resident for the whole grid.
            pl.BlockSpec((B_pad, D), lambda i, j: (0, 0)),
            # negatives: streamed; block index clamped so duplicate tiles of an
            # odd split never read out of bounds (their columns get masked).
            pl.BlockSpec(
                (tn, D),
                lambda i, j: (jnp.minimum(i * per_split + j, last_block), 0)),
        ],
        out_specs=(
            # a2n logit tiles (lane-dense).
            pl.BlockSpec(
                (B_pad, tn),
                lambda i, j: (0, jnp.minimum(i * per_split + j, last_block))),
            # per-split running max / running sum of the online logsumexp.
            pl.BlockSpec((B_pad, 1), lambda i, j: (i, 0)),
            pl.BlockSpec((B_pad, 1), lambda i, j: (i, 0)),
        ),
    )

    a2n, m_out, l_out = pl.pallas_call(
        kernel,
        grid_spec=grid_spec,
        out_shape=(
            jax.ShapeDtypeStruct((B_pad, N), jnp.float32),
            jax.ShapeDtypeStruct((num_splits * B_pad, 1), jnp.float32),
            jax.ShapeDtypeStruct((num_splits * B_pad, 1), jnp.float32),
        ),
        compiler_params=pltpu.CompilerParams(
            dimension_semantics=("parallel", "arbitrary"),
            vmem_limit_bytes=vmem_limit,
        ),
    )(p_hat, negatives)

    # O(B) epilogue: merge the per-split logsumexp states with the positive
    # logit and form the mean cross-entropy loss (target class 0).
    pos = pos_logit[:, 0]                                       # (B,)
    m_sp = m_out.reshape(num_splits, B_pad)[:, :B]              # (S, B)
    l_sp = l_out.reshape(num_splits, B_pad)[:, :B]              # (S, B)
    m_star = jnp.maximum(jnp.max(m_sp, axis=0), pos)            # (B,)
    sum_exp = jnp.exp(pos - m_star) + jnp.sum(l_sp * jnp.exp(m_sp - m_star),
                                              axis=0)
    lse = m_star + jnp.log(sum_exp)
    loss = jnp.mean(lse - pos)

    logits = jnp.concatenate([pos_logit, a2n[:B, :N]], axis=1)  # (B, 1+N)
    return loss, logits


def _reference(anchors, positives, negatives, temperature=0.07):
    eps = 1e-8
    hi = jax.lax.Precision.HIGHEST
    a = anchors.astype(jnp.float32)
    p = positives.astype(jnp.float32)
    n = negatives.astype(jnp.float32)
    an = jnp.linalg.norm(a, axis=1, keepdims=True)
    pn = jnp.linalg.norm(p, axis=1, keepdims=True)
    nn_ = jnp.linalg.norm(n, axis=1, keepdims=True)
    sim_a2p = jnp.sum(a * p, axis=1, keepdims=True) / jnp.maximum(an * pn, eps)
    sim_a2n = jnp.einsum("bd,nd->bn", p, n, precision=hi) / jnp.maximum(pn * nn_.T, eps)
    logits = jnp.concatenate([sim_a2p, sim_a2n], axis=1) / temperature
    lse = jax.scipy.special.logsumexp(logits, axis=1)
    return jnp.mean(lse - logits[:, 0]), logits


if __name__ == "__main__":
    keys = jax.random.split(jax.random.PRNGKey(0), 6)

    # Check 1: explicit small tiles -> exercises the 2-way TensorCore split,
    # the ragged boundary tile and the clamped duplicate tile (3 real tiles).
    B, D, N = 4, 128, 320
    anchors = jax.random.normal(keys[0], (B, D), dtype=jnp.float32)
    positives = jax.random.normal(keys[1], (B, D), dtype=jnp.float32)
    negatives = jax.random.normal(keys[2], (N, D), dtype=jnp.float32)

    loss, logits = pirl_loss(anchors, positives, negatives, temperature=0.07,
                             tile_n=128)
    jax.block_until_ready((loss, logits))
    ref_loss, ref_logits = _reference(anchors, positives, negatives, 0.07)
    assert logits.shape == (B, 1 + N)
    # 1e-2 abs/rel leaves margin for MXU multi-pass f32 rounding.
    assert jnp.allclose(loss, ref_loss, atol=1e-2, rtol=1e-2), (loss, ref_loss)
    assert jnp.allclose(logits, ref_logits, atol=1e-2, rtol=1e-2)

    # Check 2: auto (generation-aware) tile sizing + odd batch (sublane padding).
    B2, D2, N2 = 5, 256, 384
    a2 = jax.random.normal(keys[3], (B2, D2), dtype=jnp.float32)
    p2 = jax.random.normal(keys[4], (B2, D2), dtype=jnp.float32)
    n2 = jax.random.normal(keys[5], (N2, D2), dtype=jnp.float32)
    loss2, logits2 = pirl_loss(a2, p2, n2)
    jax.block_until_ready((loss2, logits2))
    ref_loss2, ref_logits2 = _reference(a2, p2, n2, 0.07)
    assert logits2.shape == (B2, 1 + N2)
    assert jnp.allclose(loss2, ref_loss2, atol=1e-2, rtol=1e-2)
    assert jnp.allclose(logits2, ref_logits2, atol=1e-2, rtol=1e-2)

    # Check 3: bf16 negatives stream (halves HBM traffic on the dominant input).
    neg_bf16 = negatives.astype(jnp.bfloat16)
    loss3, logits3 = pirl_loss(anchors, positives, neg_bf16, temperature=0.07,
                               tile_n=128)
    jax.block_until_ready((loss3, logits3))
    ref_loss3, ref_logits3 = _reference(anchors, positives,
                                        neg_bf16.astype(jnp.float32), 0.07)
    assert jnp.allclose(loss3, ref_loss3, atol=5e-2, rtol=5e-2)
    assert jnp.allclose(logits3, ref_logits3, atol=5e-2, rtol=5e-2)

    print("KERNEL_OK")
</pallas_src>

<mosaic_0001>
module attributes {stable_mosaic.version = 11 : i64} {
  func.func @_pirl_kernel(%arg0: i32, %arg1: i32, %arg2: memref<8x128xf32, #tpu.memory_space<vmem>>, %arg3: memref<128x128xf32, #tpu.memory_space<vmem>>, %arg4: memref<8x128xf32, #tpu.memory_space<vmem>>, %arg5: memref<8x1xf32, #tpu.memory_space<vmem>>, %arg6: memref<8x1xf32, #tpu.memory_space<vmem>>) attributes {dimension_semantics = [#tpu.dimension_semantics<parallel>, #tpu.dimension_semantics<arbitrary>], iteration_bounds = array<i64: 2, 2>, scalar_prefetch = 0 : i64, scratch_operands = 0 : i64, tpu.core_type = #tpu.core_type<tc>, window_params = [{pipeline_mode = #tpu.pipeline_mode<synchronous>, transform_indices = @transform_0, window_bounds = array<i64: 8, 128>}, {transform_indices = @transform_1, window_bounds = array<i64: 128, 128>}, {transform_indices = @transform_2, window_bounds = array<i64: 8, 128>}, {transform_indices = @transform_3, window_bounds = array<i64: 8, 1>}, {transform_indices = @transform_4, window_bounds = array<i64: 8, 1>}]} {
    %c2_i32 = arith.constant 2 : i32
    %0 = arith.muli %arg0, %c2_i32 : i32
    %1 = arith.addi %0, %arg1 : i32
    %c0_i32 = arith.constant 0 : i32
    %2 = arith.cmpi eq, %arg1, %c0_i32 : i32
    %3 = arith.extui %2 : i1 to i32
    %c0_i32_0 = arith.constant 0 : i32
    %4 = arith.cmpi ne, %3, %c0_i32_0 : i32
    scf.if %4 {
      %cst_12 = arith.constant 0xFF800000 : f32
      %26 = vector.broadcast %cst_12 : f32 to vector<8x1xf32>
      %c0_13 = arith.constant 0 : index
      %c0_14 = arith.constant 0 : index
      %27 = vector.load %arg5[%c0_13, %c0_14] : memref<8x1xf32, #tpu.memory_space<vmem>>, vector<8x1xf32>
      tpu.vector_store %arg5[%c0_13, %c0_14], %26 {strides = array<i32>} : memref<8x1xf32, #tpu.memory_space<vmem>>, vector<8x1xf32>,
      %cst_15 = arith.constant 0.000000e+00 : f32
      %28 = vector.broadcast %cst_15 : f32 to vector<8x1xf32>
      %c0_16 = arith.constant 0 : index
      %c0_17 = arith.constant 0 : index
      %29 = vector.load %arg6[%c0_16, %c0_17] : memref<8x1xf32, #tpu.memory_space<vmem>>, vector<8x1xf32>
      tpu.vector_store %arg6[%c0_16, %c0_17], %28 {strides = array<i32>} : memref<8x1xf32, #tpu.memory_space<vmem>>, vector<8x1xf32>,
    } else {
    }
    %c0 = arith.constant 0 : index
    %c0_1 = arith.constant 0 : index
    %5 = vector.load %arg2[%c0, %c0_1] : memref<8x128xf32, #tpu.memory_space<vmem>>, vector<8x128xf32>
    %c0_2 = arith.constant 0 : index
    %c0_3 = arith.constant 0 : index
    %6 = vector.load %arg3[%c0_2, %c0_3] : memref<128x128xf32, #tpu.memory_space<vmem>>, vector<128x128xf32>
    %7 = arith.mulf %6, %6 : vector<128x128xf32>
    %cst = arith.constant 1.000000e+00 : f32
    %8 = vector.broadcast %cst : f32 to vector<8x128xf32>
    %cst_4 = arith.constant dense<0.000000e+00> : vector<8x128xf32>
    %9 = tpu.matmul %8, %7, %cst_4 {dimension_numbers = #tpu.dot_dimension_numbers<[1], [1], [0], [0], [0, 0, 1, 0], [], []>, precision = #tpu.contract_precision<fp32>} : vector<8x128xf32>, vector<128x128xf32>, vector<8x128xf32> -> vector<8x128xf32>
    %10 = vector.extract_strided_slice %9 {offsets = [0, 0], sizes = [1, 128], strides = [1, 1]} : vector<8x128xf32> to vector<1x128xf32>
    %cst_5 = arith.constant 9.99999993E-9 : f32
    %11 = vector.broadcast %cst_5 : f32 to vector<1x128xf32>
    %12 = arith.maximumf %10, %11 : vector<1x128xf32>
    %13 = math.rsqrt %12 : vector<1x128xf32>
    %cst_6 = arith.constant dense<0.000000e+00> : vector<8x128xf32>
    %14 = tpu.matmul %5, %6, %cst_6 {dimension_numbers = #tpu.dot_dimension_numbers<[1], [1], [0], [0], [0, 0, 1, 0], [], []>, precision = #tpu.contract_precision<fp32>} : vector<8x128xf32>, vector<128x128xf32>, vector<8x128xf32> -> vector<8x128xf32>
    %15 = vector.broadcast %13 : vector<1x128xf32> to vector<8x128xf32>
    %16 = arith.mulf %14, %15 : vector<8x128xf32>
    %c0_7 = arith.constant 0 : index
    %c0_8 = arith.constant 0 : index
    %17 = vector.load %arg4[%c0_7, %c0_8] : memref<8x128xf32, #tpu.memory_space<vmem>>, vector<8x128xf32>
    tpu.vector_store %arg4[%c0_7, %c0_8], %16 {strides = array<i32>} : memref<8x128xf32, #tpu.memory_space<vmem>>, vector<8x128xf32>,
    %c1_i32 = arith.constant 1 : i32
    %18 = arith.addi %1, %c1_i32 : i32
    %c128_i32 = arith.constant 128 : i32
    %19 = arith.muli %18, %c128_i32 : i32
    %c320_i32 = arith.constant 320 : i32
    %20 = arith.cmpi sle, %19, %c320_i32 : i32
    %21 = arith.extui %20 : i1 to i32
    %c0_i32_9 = arith.constant 0 : i32
    %22 = arith.cmpi ne, %21, %c0_i32_9 : i32
    scf.if %22 {
      %c0_12 = arith.constant 0 : index
      %c0_13 = arith.constant 0 : index
      %26 = vector.load %arg5[%c0_12, %c0_13] : memref<8x1xf32, #tpu.memory_space<vmem>>, vector<8x1xf32>
      %cst_14 = arith.constant dense<0xFF800000> : vector<8xf32>
      %27 = vector.multi_reduction <maximumf>, %16, %cst_14 [1] : vector<8x128xf32> to vector<8xf32>
      %28 = vector.shape_cast %27 : vector<8xf32> to vector<8x1xf32>
      %29 = arith.maximumf %26, %28 : vector<8x1xf32>
      %30 = arith.subf %26, %29 : vector<8x1xf32>
      %31 = math.exp %30 : vector<8x1xf32>
      %c0_15 = arith.constant 0 : index
      %c0_16 = arith.constant 0 : index
      %32 = vector.load %arg6[%c0_15, %c0_16] : memref<8x1xf32, #tpu.memory_space<vmem>>, vector<8x1xf32>
      %33 = arith.mulf %31, %32 : vector<8x1xf32>
      %34 = vector.broadcast %29 : vector<8x1xf32> to vector<8x128xf32>
      %35 = arith.subf %16, %34 : vector<8x128xf32>
      %36 = math.exp %35 : vector<8x128xf32>
      %cst_17 = arith.constant dense<0.000000e+00> : vector<8xf32>
      %37 = vector.multi_reduction <add>, %36, %cst_17 [1] : vector<8x128xf32> to vector<8xf32>
      %38 = vector.shape_cast %37 : vector<8xf32> to vector<8x1xf32>
      %39 = arith.addf %33, %38 : vector<8x1xf32>
      %c0_18 = arith.constant 0 : index
      %c0_19 = arith.constant 0 : index
      %40 = vector.load %arg6[%c0_18, %c0_19] : memref<8x1xf32, #tpu.memory_space<vmem>>, vector<8x1xf32>
      tpu.vector_store %arg6[%c0_18, %c0_19], %39 {strides = array<i32>} : memref<8x1xf32, #tpu.memory_space<vmem>>, vector<8x1xf32>,
      %c0_20 = arith.constant 0 : index
      %c0_21 = arith.constant 0 : index
      %41 = vector.load %arg5[%c0_20, %c0_21] : memref<8x1xf32, #tpu.memory_space<vmem>>, vector<8x1xf32>
      tpu.vector_store %arg5[%c0_20, %c0_21], %29 {strides = array<i32>} : memref<8x1xf32, #tpu.memory_space<vmem>>, vector<8x1xf32>,
    } else {
    }
    %c320_i32_10 = arith.constant 320 : i32
    %23 = arith.cmpi sgt, %19, %c320_i32_10 : i32
    %24 = arith.extui %23 : i1 to i32
    %c0_i32_11 = arith.constant 0 : i32
    %25 = arith.cmpi ne, %24, %c0_i32_11 : i32
    scf.if %25 {
      %26 = tpu.iota {dimensions = array<i32: 1>} : vector<8x128xi32>
      %c128_i32_12 = arith.constant 128 : i32
      %27 = arith.muli %1, %c128_i32_12 : i32
      %28 = vector.broadcast %27 : i32 to vector<8x128xi32>
      %29 = arith.addi %26, %28 : vector<8x128xi32>
      %c320_i32_13 = arith.constant 320 : i32
      %30 = vector.broadcast %c320_i32_13 : i32 to vector<8x128xi32>
      %31 = arith.cmpi slt, %29, %30 : vector<8x128xi32>
      %cst_14 = arith.constant 0xFF800000 : f32
      %32 = vector.broadcast %cst_14 : f32 to vector<8x128xf32>
      %33 = arith.select %31, %16, %32 : vector<8x128xi1>, vector<8x128xf32>
      %c0_15 = arith.constant 0 : index
      %c0_16 = arith.constant 0 : index
      %34 = vector.load %arg5[%c0_15, %c0_16] : memref<8x1xf32, #tpu.memory_space<vmem>>, vector<8x1xf32>
      %cst_17 = arith.constant dense<0xFF800000> : vector<8xf32>
      %35 = vector.multi_reduction <maximumf>, %33, %cst_17 [1] : vector<8x128xf32> to vector<8xf32>
      %36 = vector.shape_cast %35 : vector<8xf32> to vector<8x1xf32>
      %37 = arith.maximumf %34, %36 : vector<8x1xf32>
      %38 = arith.subf %34, %37 : vector<8x1xf32>
      %39 = math.exp %38 : vector<8x1xf32>
      %c0_18 = arith.constant 0 : index
      %c0_19 = arith.constant 0 : index
      %40 = vector.load %arg6[%c0_18, %c0_19] : memref<8x1xf32, #tpu.memory_space<vmem>>, vector<8x1xf32>
      %41 = arith.mulf %39, %40 : vector<8x1xf32>
      %42 = vector.broadcast %37 : vector<8x1xf32> to vector<8x128xf32>
      %43 = arith.subf %33, %42 : vector<8x128xf32>
      %44 = math.exp %43 : vector<8x128xf32>
      %cst_20 = arith.constant dense<0.000000e+00> : vector<8xf32>
      %45 = vector.multi_reduction <add>, %44, %cst_20 [1] : vector<8x128xf32> to vector<8xf32>
      %46 = vector.shape_cast %45 : vector<8xf32> to vector<8x1xf32>
      %47 = arith.addf %41, %46 : vector<8x1xf32>
      %c0_21 = arith.constant 0 : index
      %c0_22 = arith.constant 0 : index
      %48 = vector.load %arg6[%c0_21, %c0_22] : memref<8x1xf32, #tpu.memory_space<vmem>>, vector<8x1xf32>
      tpu.vector_store %arg6[%c0_21, %c0_22], %47 {strides = array<i32>} : memref<8x1xf32, #tpu.memory_space<vmem>>, vector<8x1xf32>,
      %c0_23 = arith.constant 0 : index
      %c0_24 = arith.constant 0 : index
      %49 = vector.load %arg5[%c0_23, %c0_24] : memref<8x1xf32, #tpu.memory_space<vmem>>, vector<8x1xf32>
      tpu.vector_store %arg5[%c0_23, %c0_24], %37 {strides = array<i32>} : memref<8x1xf32, #tpu.memory_space<vmem>>, vector<8x1xf32>,
    } else {
    }
    return
  }
  func.func @transform_0(%arg0: i32, %arg1: i32) -> (i32, i32) {
    %c0_i32 = arith.constant 0 : i32
    %c0_i32_0 = arith.constant 0 : i32
    %c0_i32_1 = arith.constant 0 : i32
    return %c0_i32, %c0_i32_0 : i32, i32
  }
  func.func @transform_1(%arg0: i32, %arg1: i32) -> (i32, i32) {
    %c2_i32 = arith.constant 2 : i32
    %0 = arith.muli %arg0, %c2_i32 : i32
    %1 = arith.addi %0, %arg1 : i32
    %c2_i32_0 = arith.constant 2 : i32
    %2 = arith.minsi %1, %c2_i32_0 : i32
    %c0_i32 = arith.constant 0 : i32
    %c0_i32_1 = arith.constant 0 : i32
    return %2, %c0_i32 : i32, i32
  }
  func.func @transform_2(%arg0: i32, %arg1: i32) -> (i32, i32) {
    %c2_i32 = arith.constant 2 : i32
    %0 = arith.muli %arg0, %c2_i32 : i32
    %1 = arith.addi %0, %arg1 : i32
    %c2_i32_0 = arith.constant 2 : i32
    %2 = arith.minsi %1, %c2_i32_0 : i32
    %c0_i32 = arith.constant 0 : i32
    %c0_i32_1 = arith.constant 0 : i32
    return %c0_i32, %2 : i32, i32
  }
  func.func @transform_3(%arg0: i32, %arg1: i32) -> (i32, i32) {
    %c0_i32 = arith.constant 0 : i32
    %c0_i32_0 = arith.constant 0 : i32
    return %arg0, %c0_i32 : i32, i32
  }
  func.func @transform_4(%arg0: i32, %arg1: i32) -> (i32, i32) {
    %c0_i32 = arith.constant 0 : i32
    %c0_i32_0 = arith.constant 0 : i32
    return %arg0, %c0_i32 : i32, i32
  }
}

</mosaic_0001>

<llo_original>
// kernel: tpu_custom_call.1
$region0: #{tpu_custom_call.1}
  #allocation0 [shape = 'u32[]', space=smem, size = 0x4, offset = 0x4, fixed_abs, tag = 'smem constant byte address 0x4 - core index']
  #allocation1 [shape = 'u32[144,128]{1,0:T(1,128)}', space=vmem, size = 0x12000, scoped, tag = 'internal scratch']
  %s0 = inlined_call_operand.hbm [shape: f32[8,128], index: 0, kind: input, shape index: {}]
  %s1 = inlined_call_operand.hbm [shape: f32[320,128], index: 1, kind: input, shape index: {}]
  %s2 = inlined_call_operand.hbm [shape: f32[8,320], index: 2, kind: output, shape index: {0}]
  %s3 = inlined_call_operand.vmem [shape: f32[16,1], index: 3, kind: output, shape index: {1}]
  %s4 = inlined_call_operand.vmem [shape: f32[16,1], index: 4, kind: output, shape index: {2}]
  %5 = xla_tuple %s2, %s3, %s4
  %s6 = sld [smem:[#allocation0]]
  $region77: #{tpu_custom_call.1} parent=0
    _
  %s8 = ssub.s32 1, %s6
  %s9 = scalar_select 0, %s8, %s6
  $region1: #{tpu_custom_call.1} parent=0
    #allocation2 [shape = 'u8[4096]{0}', space=vmem, size = 0x1000, scoped, tag = 'input window, operand 0, single buffered']
    #allocation3 [shape = 's32[2]{0}', space=sflag, size = 0x8, scoped, tag = 'scoped memory for tpu_custom_call.1']
    #allocation4 [shape = 's32[2]{0}', space=sflag, size = 0x8, scoped, tag = 'scoped memory for tpu_custom_call.1']
    #allocation5 [shape = 'u8[131072]{0}', space=vmem, size = 0x20000, scoped, tag = 'input window, operand 1']
    #allocation6 [shape = 's32[2]{0}', space=sflag, size = 0x8, scoped, tag = 'scoped memory for tpu_custom_call.1']
    #allocation7 [shape = 'u8[8192]{0}', space=vmem, size = 0x2000, scoped, tag = 'output window, operand 0']
    %10 = vsyncpa [#allocation3], 0
    %11 = vsyncpa [#allocation6], 0
    %s12 = scalar_lea.sflag [#allocation6], 1
    %13 = vsyncpa %s12, 0
    %14 = vsyncpa [#allocation4], 0
    %s15 = scalar_lea.sflag [#allocation4], 1
    %16 = vsyncpa %s15, 0
    loop: start=0, step=1, limit=6
    $region2: #{tpu_custom_call.1} parent=1 // loop_pre_header
      _
    $region3: #{tpu_custom_call.1} parent=1 // loop_header
      %s18 = sphi 0, %s22
      %p19 = scmp.ge.s32.totalorder %s18, 6
      %s25 = sphi 0, %s37
      %s26 = sphi 0, %s33
      %s27 = sphi 0, %s25
      %s28 = sphi 0, %s26
      %s29 = sphi 0, %s27
      %s30 = sphi 0, %s28
      %s38 = sphi 0, %s38
      %s40 = sphi 0, %s38
      %s41 = sphi 0, %s40
      %s55 = sphi 0, %s41
      %s69 = sphi 0, %s71
      %s72 = sphi 0, %s69
      %s73 = sphi 0, %s72
      %s89 = sphi 0, %s73
      %s103 = sphi 0, %s105
      %s106 = sphi 0, %s103
      %s107 = sphi 0, %s106
      %s123 = sphi 0, %s107
      %s129 = sphi 0, %s131
      %s132 = sphi 0, %s129
      %s133 = sphi 0, %s132
      %s149 = sphi 0, %s133
      %s155 = sphi 0, %s157
      %s158 = sphi 0, %s155
      %s159 = sphi 0, %s158
      %s175 = sphi 0, %s159
    $region4: #{tpu_custom_call.1} parent=1 // loop_header_branch
      %21 = sbr.rel (%p19) target = $region8
    $region5: #{tpu_custom_call.1} parent=1 // loop_body
      %s23 = ssub.s32 %s18, 1
      %s24 = ssub.s32 %s18, 2
      %s31 = sadd.s32 1, %s26
      %p32 = scmp.ge.s32.totalorder %s31, 2
      %s33 = scalar_select %p32, 0, %s31
      %s34 = sadd.s32 1, %s25
      %s35 = scalar_select %p32, %s34, %s25
      %p36 = scmp.ge.s32.totalorder %s35, 2
      %s37 = scalar_select %p36, 0, %s35
      %s39 = sadd.s32 %s38, 1
      %p42 = scmp.eq.s32.totalorder %s18, 3
      %p43 = scmp.ne.s32.totalorder %s38, %s40
      %p44 = scmp.eq.s32.totalorder %s18, 0
      %p45 = por %p43, %p44
      %p46 = scmp.ne.s32.totalorder %s38, %s40
      %p47 = scmp.eq.s32.totalorder %s23, 3
      %p48 = por %p46, %p47
      %p49 = scmp.ne.s32.totalorder %s40, %s41
      %p50 = scmp.eq.s32.totalorder %s23, 0
      %p51 = por %p49, %p50
      %p52 = scmp.ne.s32.totalorder %s40, %s41
      %p53 = scmp.eq.s32.totalorder %s24, 3
      %p54 = por %p52, %p53
      %p56 = scmp.ne.s32.totalorder %s41, %s55
      %p57 = scmp.eq.s32.totalorder %s24, 0
      %p58 = por %p56, %p57
      %s59 = smul.u32 %s25, 2
      %s60 = sadd.s32 %s59, %s26
      %p61 = scmp.lt.s32.totalorder %s60, 2
      %s62 = scalar_select %p61, %s60, 2
      %s63 = smul.u32 %s37, 2
      %s64 = sadd.s32 %s63, %s33
      %p65 = scmp.lt.s32.totalorder %s64, 2
      %s66 = scalar_select %p65, %s64, 2
      %s67 = ssub.s32 %s62, %s66
      %p68 = scmp.eq.s32.totalorder %s67, 0
      %s70 = sadd.s32 %s69, 1
      %s71 = scalar_select %p68, %s69, %s70
      %p74 = pneg %p68
      %p75 = scmp.eq.s32.totalorder %s18, 3
      %p76 = por %p74, %p75
      %p77 = scmp.ne.s32.totalorder %s69, %s72
      %p78 = scmp.eq.s32.totalorder %s18, 0
      %p79 = por %p77, %p78
      %p80 = scmp.ne.s32.totalorder %s69, %s72
      %p81 = scmp.eq.s32.totalorder %s23, 3
      %p82 = por %p80, %p81
      %p83 = scmp.ne.s32.totalorder %s72, %s73
      %p84 = scmp.eq.s32.totalorder %s23, 0
      %p85 = por %p83, %p84
      %p86 = scmp.ne.s32.totalorder %s72, %s73
      %p87 = scmp.eq.s32.totalorder %s24, 3
      %p88 = por %p86, %p87
      %p90 = scmp.ne.s32.totalorder %s73, %s89
      %p91 = scmp.eq.s32.totalorder %s24, 0
      %p92 = por %p90, %p91
      %s93 = smul.u32 %s25, 2
      %s94 = sadd.s32 %s93, %s26
      %p95 = scmp.lt.s32.totalorder %s94, 2
      %s96 = scalar_select %p95, %s94, 2
      %s97 = smul.u32 %s37, 2
      %s98 = sadd.s32 %s97, %s33
      %p99 = scmp.lt.s32.totalorder %s98, 2
      %s100 = scalar_select %p99, %s98, 2
      %s101 = ssub.s32 %s96, %s100
      %p102 = scmp.eq.s32.totalorder %s101, 0
      %s104 = sadd.s32 %s103, 1
      %s105 = scalar_select %p102, %s103, %s104
      %p108 = pneg %p102
      %p109 = scmp.eq.s32.totalorder %s18, 3
      %p110 = por %p108, %p109
      %p111 = scmp.ne.s32.totalorder %s103, %s106
      %p112 = scmp.eq.s32.totalorder %s18, 0
      %p113 = por %p111, %p112
      %p114 = scmp.ne.s32.totalorder %s103, %s106
      %p115 = scmp.eq.s32.totalorder %s23, 3
      %p116 = por %p114, %p115
      %p117 = scmp.ne.s32.totalorder %s106, %s107
      %p118 = scmp.eq.s32.totalorder %s23, 0
      %p119 = por %p117, %p118
      %p120 = scmp.ne.s32.totalorder %s106, %s107
      %p121 = scmp.eq.s32.totalorder %s24, 3
      %p122 = por %p120, %p121
      %p124 = scmp.ne.s32.totalorder %s107, %s123
      %p125 = scmp.eq.s32.totalorder %s24, 0
      %p126 = por %p124, %p125
      %s127 = ssub.s32 %s25, %s37
      %p128 = scmp.eq.s32.totalorder %s127, 0
      %s130 = sadd.s32 %s129, 1
      %s131 = scalar_select %p128, %s129, %s130
      %p134 = pneg %p128
      %p135 = scmp.eq.s32.totalorder %s18, 3
      %p136 = por %p134, %p135
      %p137 = scmp.ne.s32.totalorder %s129, %s132
      %p138 = scmp.eq.s32.totalorder %s18, 0
      %p139 = por %p137, %p138
      %p140 = scmp.ne.s32.totalorder %s129, %s132
      %p141 = scmp.eq.s32.totalorder %s23, 3
      %p142 = por %p140, %p141
      %p143 = scmp.ne.s32.totalorder %s132, %s133
      %p144 = scmp.eq.s32.totalorder %s23, 0
      %p145 = por %p143, %p144
      %p146 = scmp.ne.s32.totalorder %s132, %s133
      %p147 = scmp.eq.s32.totalorder %s24, 3
      %p148 = por %p146, %p147
      %p150 = scmp.ne.s32.totalorder %s133, %s149
      %p151 = scmp.eq.s32.totalorder %s24, 0
      %p152 = por %p150, %p151
      %s153 = ssub.s32 %s25, %s37
      %p154 = scmp.eq.s32.totalorder %s153, 0
      %s156 = sadd.s32 %s155, 1
      %s157 = scalar_select %p154, %s155, %s156
      %p160 = pneg %p154
      %p161 = scmp.eq.s32.totalorder %s18, 3
      %p162 = por %p160, %p161
      %p163 = scmp.ne.s32.totalorder %s155, %s158
      %p164 = scmp.eq.s32.totalorder %s18, 0
      %p165 = por %p163, %p164
      %p166 = scmp.ne.s32.totalorder %s155, %s158
      %p167 = scmp.eq.s32.totalorder %s23, 3
      %p168 = por %p166, %p167
      %p169 = scmp.ne.s32.totalorder %s158, %s159
      %p170 = scmp.eq.s32.totalorder %s23, 0
      %p171 = por %p169, %p170
      %p172 = scmp.ne.s32.totalorder %s158, %s159
      %p173 = scmp.eq.s32.totalorder %s24, 3
      %p174 = por %p172, %p173
      %p176 = scmp.ne.s32.totalorder %s159, %s175
      %p177 = scmp.eq.s32.totalorder %s24, 0
      %p178 = por %p176, %p177
      %p179 = scmp.le.s32.totalorder 1, %s18
      %p180 = scmp.lt.s32.totalorder %s18, 5
      %p181 = pnand %p179, %p180
      %p182 = pneg %p181
      // Predicated region
      $region9: #{tpu_custom_call.1} parent=5 // pred_check
        _
      $region10: #{tpu_custom_call.1} parent=5 // pred_check_branch
        %184 = sbr.rel (%p181) target = $region12
      $region11: #{tpu_custom_call.1} parent=5 // pred_region
        %s185 = ssub.s32 %s18, 1
        // Predicated region
        $region13: #{tpu_custom_call.1} parent=11 // pred_check
          %p186 = pneg %p51
        $region14: #{tpu_custom_call.1} parent=11 // pred_check_branch
          %188 = sbr.rel (%p186) target = $region16
        $region15: #{tpu_custom_call.1} parent=11 // pred_region
          %s190 = ssub.s32 128, 128
          %191 = vsyncadd [#allocation3], %s190
          %s193 = sshll.u32 [#allocation2], 4
          %s194 = int_to_ptr.vmem [resolvable:$true] %s193
          %196 = dma.hbm_to_vmem [thread:$0]  %s0, 128, %s194, [#allocation3]
        $region16: #{tpu_custom_call.1} parent=11 // pred_fallthru
          _
      $region12: #{tpu_custom_call.1} parent=5 // pred_fallthru
        _
      %p197 = scmp.lt.s32.totalorder %s18, 4
      // Predicated region
      $region17: #{tpu_custom_call.1} parent=5 // pred_check
        %p198 = pneg %p197
      $region18: #{tpu_custom_call.1} parent=5 // pred_check_branch
        %200 = sbr.rel (%p198) target = $region20
      $region19: #{tpu_custom_call.1} parent=5 // pred_region
        // Predicated region
        $region21: #{tpu_custom_call.1} parent=19 // pred_check
          %p201 = pneg %p79
        $region22: #{tpu_custom_call.1} parent=19 // pred_check_branch
          %203 = sbr.rel (%p201) target = $region24
        $region23: #{tpu_custom_call.1} parent=19 // pred_region
          %s204 = sand.u32 %s69, 1
          %s205 = scalar_lea.sflag [#allocation6], %s204
          %s206 = sand.u32 %s69, 1
          %s207 = smul.addr %s206, 128
          %s208 = scalar_lea.vmem [#allocation5], %s207
          %s209 = smul.u32 %s25, 2
          %s210 = sadd.s32 %s209, %s26
          %p211 = scmp.lt.s32.totalorder %s210, 2
          %s212 = scalar_select %p211, %s210, 2
          %s213 = smul.u32 16, %s212
          %s214 = ssub.s32 40, %s213
          %p215 = scmp.lt.s32.totalorder %s214, 16
          %s216 = scalar_select %p215, %s214, 16
          %s217 = smul.u32 128, %s216
          %s219 = ssub.s32 2048, %s217
          %220 = vsyncadd %s205, %s219
          %p221 = scmp.ne.s32.totalorder 0, %s217
          %s222 = smul.addr %s213, 128
          %s223 = scalar_lea.hbm %s1, %s222
          %s224 = smul.u32 8, %s216
          %s225 = sshll.u32 %s208, 4
          %s226 = int_to_ptr.vmem [resolvable:$true] %s225
          %s227 = sshll.u32 %s224, 4
          %231 = dma.hbm_to_vmem [thread:$0]  (%p221), %s223, %s227, %s226, %s205, 128, 128, 8
        $region24: #{tpu_custom_call.1} parent=19 // pred_fallthru
          _
      $region20: #{tpu_custom_call.1} parent=5 // pred_fallthru
        _
      %p232 = scmp.le.s32.totalorder 1, %s18
      %p233 = scmp.lt.s32.totalorder %s18, 5
      %p234 = pnand %p232, %p233
      %p235 = pneg %p234
      // Predicated region
      $region25: #{tpu_custom_call.1} parent=5 // pred_check
        _
      $region26: #{tpu_custom_call.1} parent=5 // pred_check_branch
        %237 = sbr.rel (%p234) target = $region28
      $region27: #{tpu_custom_call.1} parent=5 // pred_region
        %s238 = ssub.s32 %s18, 1
        // Predicated region
        $region29: #{tpu_custom_call.1} parent=27 // pred_check
          %p239 = pneg %p51
        $region30: #{tpu_custom_call.1} parent=27 // pred_check_branch
          %241 = sbr.rel (%p239) target = $region32
        $region31: #{tpu_custom_call.1} parent=27 // pred_region
          %242 = dma.done [#allocation3], 128
        $region32: #{tpu_custom_call.1} parent=27 // pred_fallthru
          _
        %s243 = sand.u32 %s72, 1
        %s244 = scalar_lea.sflag [#allocation6], %s243
        %s245 = sand.u32 %s72, 1
        %s246 = smul.addr %s245, 128
        %s247 = scalar_lea.vmem [#allocation5], %s246
        // Predicated region
        $region33: #{tpu_custom_call.1} parent=27 // pred_check
          %p248 = pneg %p85
        $region34: #{tpu_custom_call.1} parent=27 // pred_check_branch
          %250 = sbr.rel (%p248) target = $region36
        $region35: #{tpu_custom_call.1} parent=27 // pred_region
          %251 = dma.done %s244, 2048
        $region36: #{tpu_custom_call.1} parent=27 // pred_fallthru
          _
        %p252 = pneg %p51
        %p253 = pneg %p48
        %s254 = sand.u32 %s72, 1
        %s255 = scalar_lea.sflag [#allocation6], %s254
        %s256 = sand.u32 %s72, 1
        %s257 = smul.addr %s256, 128
        %s258 = scalar_lea.vmem [#allocation5], %s257
        %p259 = pneg %p85
        %p260 = pneg %p82
        %p261 = pneg %p119
        %p262 = pneg %p116
        %s263 = sand.u32 %s106, 1
        %s264 = scalar_lea.sflag [#allocation4], %s263
        %s265 = sand.u32 %s106, 1
        %s266 = smul.addr %s265, 8
        %s267 = scalar_lea.vmem [#allocation7], %s266
        %p268 = pneg %p145
        %p269 = pneg %p142
        %p270 = scmp.lt.s32.totalorder %s27, 1
        %s271 = scalar_select %p270, %s27, 1
        %s272 = smul.addr %s271, 8
        %s273 = scalar_lea.vmem %s3, %s272
        %p274 = pneg %p171
        %p275 = pneg %p168
        %p276 = scmp.lt.s32.totalorder %s27, 1
        %s277 = scalar_select %p276, %s27, 1
        %s278 = smul.addr %s277, 8
        %s279 = scalar_lea.vmem %s4, %s278
        %s280 = smul.u32 %s27, 2
        %s281 = sadd.s32 %s280, %s28
        %p282 = scmp.lt.s32.totalorder %s281, 2
        %s283 = scalar_select %p282, %s281, 2
        %s284 = smul.u32 16, %s283
        %s285 = ssub.s32 40, %s284
        %p286 = scmp.lt.s32.totalorder %s285, 16
        %s287 = scalar_select %p286, %s285, 16
        %s288 = smul.u32 128, %s287
        %s289 = smul.u32 %s27, 2
        %s290 = sadd.s32 %s289, %s28
        %p291 = scmp.lt.s32.totalorder %s290, 2
        %s292 = scalar_select %p291, %s290, 2
        %p293 = scmp.lt.s32.totalorder %s27, 1
        %s294 = scalar_select %p293, %s27, 1
        %s295 = smul.addr %s294, 8
        %s296 = scalar_lea.vmem %s3, %s295
        %p297 = scmp.lt.s32.totalorder %s27, 1
        %s298 = scalar_select %p297, %s27, 1
        %s299 = smul.addr %s298, 8
        %s300 = scalar_lea.vmem %s4, %s299
        %s301 = smul.u32 %s27, 2
        %s302 = sadd.s32 %s301, %s28
        %p303 = scmp.eq.s32.totalorder %s28, 0
        // Predicated region
        $region37: #{tpu_custom_call.1} parent=27 // pred_check
          %p304 = pneg %p303
        $region38: #{tpu_custom_call.1} parent=27 // pred_check_branch
          %306 = sbr.rel (%p304) target = $region40
        $region39: #{tpu_custom_call.1} parent=27 // pred_region
          %vm307 = vcmask 7168
          %308 = vst.msk [vmem:[%s296] sm:$0xff] %vm307, -inf
          %309 = vst.msk [vmem:[%s300] sm:$0xff] %vm307, 0.0
        $region40: #{tpu_custom_call.1} parent=27 // pred_fallthru
          _
        %v310 = vld [vmem:[#allocation2] sm:$0xff]
        %v311 = vld [vmem:[%s247] sm:$0xff]
        %v312 = vld [vmem:[%s247 + $0x8] sm:$0xff]
        %v313 = vld [vmem:[%s247 + $0x10] sm:$0xff]
        %v314 = vld [vmem:[%s247 + $0x18] sm:$0xff]
        %v315 = vld [vmem:[%s247 + $0x20] sm:$0xff]
        %v316 = vld [vmem:[%s247 + $0x28] sm:$0xff]
        %v317 = vld [vmem:[%s247 + $0x30] sm:$0xff]
        %v318 = vld [vmem:[%s247 + $0x38] sm:$0xff]
        %v319 = vld [vmem:[%s247 + $0x40] sm:$0xff]
        %v320 = vld [vmem:[%s247 + $0x48] sm:$0xff]
        %v321 = vld [vmem:[%s247 + $0x50] sm:$0xff]
        %v322 = vld [vmem:[%s247 + $0x58] sm:$0xff]
        %v323 = vld [vmem:[%s247 + $0x60] sm:$0xff]
        %v324 = vld [vmem:[%s247 + $0x68] sm:$0xff]
        %v325 = vld [vmem:[%s247 + $0x70] sm:$0xff]
        %v326 = vld [vmem:[%s247 + $0x78] sm:$0xff]
        %v327 = vmul.f32 %v311, %v311
        %v328 = vmul.f32 %v312, %v312
        %v329 = vmul.f32 %v313, %v313
        %v330 = vmul.f32 %v314, %v314
        %v331 = vmul.f32 %v315, %v315
        %v332 = vmul.f32 %v316, %v316
        %v333 = vmul.f32 %v317, %v317
        %v334 = vmul.f32 %v318, %v318
        %v335 = vmul.f32 %v319, %v319
        %v336 = vmul.f32 %v320, %v320
        %v337 = vmul.f32 %v321, %v321
        %v338 = vmul.f32 %v322, %v322
        %v339 = vmul.f32 %v323, %v323
        %v340 = vmul.f32 %v324, %v324
        %v341 = vmul.f32 %v325, %v325
        %v342 = vmul.f32 %v326, %v326
        %343 = vmatprep.subr.mxu0 0.0
        %v344 = vand.u32 %v327, 4294901760
        %345 = vmatpush1.xpose.msra.mxu0 %v344
        %346 = vmatprep.subr.mxu0 0.0
        %v347 = vand.u32 %v328, 4294901760
        %348 = vmatpush1.xpose.msra.mxu0 %v347
        %349 = vmatprep.subr.mxu0 0.0
        %v350 = vand.u32 %v329, 4294901760
        %351 = vmatpush1.xpose.msra.mxu0 %v350
        %352 = vmatprep.subr.mxu0 0.0
        %v353 = vand.u32 %v330, 4294901760
        %354 = vmatpush1.xpose.msra.mxu0 %v353
        %355 = vmatprep.subr.mxu0 0.0
        %v356 = vand.u32 %v331, 4294901760
        %357 = vmatpush1.xpose.msra.mxu0 %v356
        %358 = vmatprep.subr.mxu0 0.0
        %v359 = vand.u32 %v332, 4294901760
        %360 = vmatpush1.xpose.msra.mxu0 %v359
        %361 = vmatprep.subr.mxu0 0.0
        %v362 = vand.u32 %v333, 4294901760
        %363 = vmatpush1.xpose.msra.mxu0 %v362
        %364 = vmatprep.subr.mxu0 0.0
        %v365 = vand.u32 %v334, 4294901760
        %366 = vmatpush1.xpose.msra.mxu0 %v365
        %367 = vmatprep.subr.mxu0 0.0
        %v368 = vand.u32 %v335, 4294901760
        %369 = vmatpush1.xpose.msra.mxu0 %v368
        %370 = vmatprep.subr.mxu0 0.0
        %v371 = vand.u32 %v336, 4294901760
        %372 = vmatpush1.xpose.msra.mxu0 %v371
        %373 = vmatprep.subr.mxu0 0.0
        %v374 = vand.u32 %v337, 4294901760
        %375 = vmatpush1.xpose.msra.mxu0 %v374
        %376 = vmatprep.subr.mxu0 0.0
        %v377 = vand.u32 %v338, 4294901760
        %378 = vmatpush1.xpose.msra.mxu0 %v377
        %379 = vmatprep.subr.mxu0 0.0
        %v380 = vand.u32 %v339, 4294901760
        %381 = vmatpush1.xpose.msra.mxu0 %v380
        %382 = vmatprep.subr.mxu0 0.0
        %v383 = vand.u32 %v340, 4294901760
        %384 = vmatpush1.xpose.msra.mxu0 %v383
        %385 = vmatprep.subr.mxu0 0.0
        %v386 = vand.u32 %v341, 4294901760
        %387 = vmatpush1.xpose.msra.mxu0 %v386
        %388 = vmatprep.subr.mxu0 0.0
        %v389 = vand.u32 %v342, 4294901760
        %390 = vmatpush1.xpose.msra.mxu0 %v389
        %391 = vmatprep.subr.mxu0 0.0
        %392 = vmatpush1.xpose.msra.mxu0 0.0
        %393 = vmatprep.subr.mxu0 0.0
        %394 = vmatpush1.xpose.msra.mxu0 0.0
        %395 = vmatprep.subr.mxu0 0.0
        %396 = vmatpush1.xpose.msra.mxu0 0.0
        %397 = vmatprep.subr.mxu0 0.0
        %398 = vmatpush1.xpose.msra.mxu0 0.0
        %399 = vmatprep.subr.mxu0 0.0
        %400 = vmatpush1.xpose.msra.mxu0 0.0
        %401 = vmatprep.subr.mxu0 0.0
        %402 = vmatpush1.xpose.msra.mxu0 0.0
        %403 = vmatprep.subr.mxu0 0.0
        %404 = vmatpush1.xpose.msra.mxu0 0.0
        %405 = vmatprep.subr.mxu0 0.0
        %406 = vmatpush1.xpose.msra.mxu0 0.0
        %407 = vmatprep.subr.mxu0 0.0
        %408 = vmatpush1.xpose.msra.mxu0 0.0
        %409 = vmatprep.subr.mxu0 0.0
        %410 = vmatpush1.xpose.msra.mxu0 0.0
        %411 = vmatprep.subr.mxu0 0.0
        %412 = vmatpush1.xpose.msra.mxu0 0.0
        %413 = vmatprep.subr.mxu0 0.0
        %414 = vmatpush1.xpose.msra.mxu0 0.0
        %415 = vmatprep.subr.mxu0 0.0
        %416 = vmatpush1.xpose.msra.mxu0 0.0
        %417 = vmatprep.subr.mxu0 0.0
        %418 = vmatpush1.xpose.msra.mxu0 0.0
        %419 = vmatprep.subr.mxu0 0.0
        %420 = vmatpush1.xpose.msra.mxu0 0.0
        %421 = vmatprep.subr.mxu0 0.0
        %422 = vmatpush1.xpose.msra.mxu0 0.0
        %423 = vmatprep.mubr.f32.mxu0 0.0
        %424 = vmatmul.mubr.f32.gmra.mrb[0].mxu0 0.0
        %v425 = vpop.f32.mrb[0].mxu0
        %v426 = vadd.f32 0.0, %v425
        %v427 = vpop.f32.mrb[0].mxu0
        %428 = vdwg.mxu0
        %429 = vmatprep.subr.mxu0 0.0
        %v430 = vand.u32 %v327, 4294901760
        %v431 = vsub.f32 %v327, %v430
        %v432 = vand.u32 %v431, 4294901760
        %v433 = vsub.f32 %v431, %v432
        %v434 = vand.u32 %v433, 4294901760
        %435 = vmatpush1.xpose.msra.mxu0 %v434
        %436 = vmatprep.subr.mxu0 0.0
        %v437 = vand.u32 %v328, 4294901760
        %v438 = vsub.f32 %v328, %v437
        %v439 = vand.u32 %v438, 4294901760
        %v440 = vsub.f32 %v438, %v439
        %v441 = vand.u32 %v440, 4294901760
        %442 = vmatpush1.xpose.msra.mxu0 %v441
        %443 = vmatprep.subr.mxu0 0.0
        %v444 = vand.u32 %v329, 4294901760
        %v445 = vsub.f32 %v329, %v444
        %v446 = vand.u32 %v445, 4294901760
        %v447 = vsub.f32 %v445, %v446
        %v448 = vand.u32 %v447, 4294901760
        %449 = vmatpush1.xpose.msra.mxu0 %v448
        %450 = vmatprep.subr.mxu0 0.0
        %v451 = vand.u32 %v330, 4294901760
        %v452 = vsub.f32 %v330, %v451
        %v453 = vand.u32 %v452, 4294901760
        %v454 = vsub.f32 %v452, %v453
        %v455 = vand.u32 %v454, 4294901760
        %456 = vmatpush1.xpose.msra.mxu0 %v455
        %457 = vmatprep.subr.mxu0 0.0
        %v458 = vand.u32 %v331, 4294901760
        %v459 = vsub.f32 %v331, %v458
        %v460 = vand.u32 %v459, 4294901760
        %v461 = vsub.f32 %v459, %v460
        %v462 = vand.u32 %v461, 4294901760
        %463 = vmatpush1.xpose.msra.mxu0 %v462
        %464 = vmatprep.subr.mxu0 0.0
        %v465 = vand.u32 %v332, 4294901760
        %v466 = vsub.f32 %v332, %v465
        %v467 = vand.u32 %v466, 4294901760
        %v468 = vsub.f32 %v466, %v467
        %v469 = vand.u32 %v468, 4294901760
        %470 = vmatpush1.xpose.msra.mxu0 %v469
        %471 = vmatprep.subr.mxu0 0.0
        %v472 = vand.u32 %v333, 4294901760
        %v473 = vsub.f32 %v333, %v472
        %v474 = vand.u32 %v473, 4294901760
        %v475 = vsub.f32 %v473, %v474
        %v476 = vand.u32 %v475, 4294901760
        %477 = vmatpush1.xpose.msra.mxu0 %v476
        %478 = vmatprep.subr.mxu0 0.0
        %v479 = vand.u32 %v334, 4294901760
        %v480 = vsub.f32 %v334, %v479
        %v481 = vand.u32 %v480, 4294901760
        %v482 = vsub.f32 %v480, %v481
        %v483 = vand.u32 %v482, 4294901760
        %484 = vmatpush1.xpose.msra.mxu0 %v483
        %485 = vmatprep.subr.mxu0 0.0
        %v486 = vand.u32 %v335, 4294901760
        %v487 = vsub.f32 %v335, %v486
        %v488 = vand.u32 %v487, 4294901760
        %v489 = vsub.f32 %v487, %v488
        %v490 = vand.u32 %v489, 4294901760
        %491 = vmatpush1.xpose.msra.mxu0 %v490
        %492 = vmatprep.subr.mxu0 0.0
        %v493 = vand.u32 %v336, 4294901760
        %v494 = vsub.f32 %v336, %v493
        %v495 = vand.u32 %v494, 4294901760
        %v496 = vsub.f32 %v494, %v495
        %v497 = vand.u32 %v496, 4294901760
        %498 = vmatpush1.xpose.msra.mxu0 %v497
        %499 = vmatprep.subr.mxu0 0.0
        %v500 = vand.u32 %v337, 4294901760
        %v501 = vsub.f32 %v337, %v500
        %v502 = vand.u32 %v501, 4294901760
        %v503 = vsub.f32 %v501, %v502
        %v504 = vand.u32 %v503, 4294901760
        %505 = vmatpush1.xpose.msra.mxu0 %v504
        %506 = vmatprep.subr.mxu0 0.0
        %v507 = vand.u32 %v338, 4294901760
        %v508 = vsub.f32 %v338, %v507
        %v509 = vand.u32 %v508, 4294901760
        %v510 = vsub.f32 %v508, %v509
        %v511 = vand.u32 %v510, 4294901760
        %512 = vmatpush1.xpose.msra.mxu0 %v511
        %513 = vmatprep.subr.mxu0 0.0
        %v514 = vand.u32 %v339, 4294901760
        %v515 = vsub.f32 %v339, %v514
        %v516 = vand.u32 %v515, 4294901760
        %v517 = vsub.f32 %v515, %v516
        %v518 = vand.u32 %v517, 4294901760
        %519 = vmatpush1.xpose.msra.mxu0 %v518
        %520 = vmatprep.subr.mxu0 0.0
        %v521 = vand.u32 %v340, 4294901760
        %v522 = vsub.f32 %v340, %v521
        %v523 = vand.u32 %v522, 4294901760
        %v524 = vsub.f32 %v522, %v523
        %v525 = vand.u32 %v524, 4294901760
        %526 = vmatpush1.xpose.msra.mxu0 %v525
        %527 = vmatprep.subr.mxu0 0.0
        %v528 = vand.u32 %v341, 4294901760
        %v529 = vsub.f32 %v341, %v528
        %v530 = vand.u32 %v529, 4294901760
        %v531 = vsub.f32 %v529, %v530
        %v532 = vand.u32 %v531, 4294901760
        %533 = vmatpush1.xpose.msra.mxu0 %v532
        %534 = vmatprep.subr.mxu0 0.0
        %v535 = vand.u32 %v342, 4294901760
        %v536 = vsub.f32 %v342, %v535
        %v537 = vand.u32 %v536, 4294901760
        %v538 = vsub.f32 %v536, %v537
        %v539 = vand.u32 %v538, 4294901760
        %540 = vmatpush1.xpose.msra.mxu0 %v539
        %541 = vmatprep.subr.mxu0 0.0
        %542 = vmatpush1.xpose.msra.mxu0 0.0
        %543 = vmatprep.subr.mxu0 0.0
        %544 = vmatpush1.xpose.msra.mxu0 0.0
        %545 = vmatprep.subr.mxu0 0.0
        %546 = vmatpush1.xpose.msra.mxu0 0.0
        %547 = vmatprep.subr.mxu0 0.0
        %548 = vmatpush1.xpose.msra.mxu0 0.0
        %549 = vmatprep.subr.mxu0 0.0
        %550 = vmatpush1.xpose.msra.mxu0 0.0
        %551 = vmatprep.subr.mxu0 0.0
        %552 = vmatpush1.xpose.msra.mxu0 0.0
        %553 = vmatprep.subr.mxu0 0.0
        %554 = vmatpush1.xpose.msra.mxu0 0.0
        %555 = vmatprep.subr.mxu0 0.0
        %556 = vmatpush1.xpose.msra.mxu0 0.0
        %557 = vmatprep.subr.mxu0 0.0
        %558 = vmatpush1.xpose.msra.mxu0 0.0
        %559 = vmatprep.subr.mxu0 0.0
        %560 = vmatpush1.xpose.msra.mxu0 0.0
        %561 = vmatprep.subr.mxu0 0.0
        %562 = vmatpush1.xpose.msra.mxu0 0.0
        %563 = vmatprep.subr.mxu0 0.0
        %564 = vmatpush1.xpose.msra.mxu0 0.0
        %565 = vmatprep.subr.mxu0 0.0
        %566 = vmatpush1.xpose.msra.mxu0 0.0
        %567 = vmatprep.subr.mxu0 0.0
        %568 = vmatpush1.xpose.msra.mxu0 0.0
        %569 = vmatprep.subr.mxu0 0.0
        %570 = vmatpush1.xpose.msra.mxu0 0.0
        %571 = vmatprep.subr.mxu0 0.0
        %572 = vmatpush1.xpose.msra.mxu0 0.0
        %573 = vmatprep.mubr.f32.mxu0 0.0
        %574 = vmatmul.mubr.f32.gmra.mrb[0].mxu0 1.0
        %v575 = vpop.f32.mrb[0].mxu0
        %v576 = vadd.f32 %v426, %v575
        %v577 = vpop.f32.mrb[0].mxu0
        %578 = vdwg.mxu0
        %579 = vmatprep.subr.mxu0 0.0
        %v580 = vand.u32 %v327, 4294901760
        %v581 = vsub.f32 %v327, %v580
        %582 = vmatpush1.xpose.msra.mxu0 %v581
        %583 = vmatprep.subr.mxu0 0.0
        %v584 = vand.u32 %v328, 4294901760
        %v585 = vsub.f32 %v328, %v584
        %586 = vmatpush1.xpose.msra.mxu0 %v585
        %587 = vmatprep.subr.mxu0 0.0
        %v588 = vand.u32 %v329, 4294901760
        %v589 = vsub.f32 %v329, %v588
        %590 = vmatpush1.xpose.msra.mxu0 %v589
        %591 = vmatprep.subr.mxu0 0.0
        %v592 = vand.u32 %v330, 4294901760
        %v593 = vsub.f32 %v330, %v592
        %594 = vmatpush1.xpose.msra.mxu0 %v593
        %595 = vmatprep.subr.mxu0 0.0
        %v596 = vand.u32 %v331, 4294901760
        %v597 = vsub.f32 %v331, %v596
        %598 = vmatpush1.xpose.msra.mxu0 %v597
        %599 = vmatprep.subr.mxu0 0.0
        %v600 = vand.u32 %v332, 4294901760
        %v601 = vsub.f32 %v332, %v600
        %602 = vmatpush1.xpose.msra.mxu0 %v601
        %603 = vmatprep.subr.mxu0 0.0
        %v604 = vand.u32 %v333, 4294901760
        %v605 = vsub.f32 %v333, %v604
        %606 = vmatpush1.xpose.msra.mxu0 %v605
        %607 = vmatprep.subr.mxu0 0.0
        %v608 = vand.u32 %v334, 4294901760
        %v609 = vsub.f32 %v334, %v608
        %610 = vmatpush1.xpose.msra.mxu0 %v609
        %611 = vmatprep.subr.mxu0 0.0
        %v612 = vand.u32 %v335, 4294901760
        %v613 = vsub.f32 %v335, %v612
        %614 = vmatpush1.xpose.msra.mxu0 %v613
        %615 = vmatprep.subr.mxu0 0.0
        %v616 = vand.u32 %v336, 4294901760
        %v617 = vsub.f32 %v336, %v616
        %618 = vmatpush1.xpose.msra.mxu0 %v617
        %619 = vmatprep.subr.mxu0 0.0
        %v620 = vand.u32 %v337, 4294901760
        %v621 = vsub.f32 %v337, %v620
        %622 = vmatpush1.xpose.msra.mxu0 %v621
        %623 = vmatprep.subr.mxu0 0.0
        %v624 = vand.u32 %v338, 4294901760
        %v625 = vsub.f32 %v338, %v624
        %626 = vmatpush1.xpose.msra.mxu0 %v625
        %627 = vmatprep.subr.mxu0 0.0
        %v628 = vand.u32 %v339, 4294901760
        %v629 = vsub.f32 %v339, %v628
        %630 = vmatpush1.xpose.msra.mxu0 %v629
        %631 = vmatprep.subr.mxu0 0.0
        %v632 = vand.u32 %v340, 4294901760
        %v633 = vsub.f32 %v340, %v632
        %634 = vmatpush1.xpose.msra.mxu0 %v633
        %635 = vmatprep.subr.mxu0 0.0
        %v636 = vand.u32 %v341, 4294901760
        %v637 = vsub.f32 %v341, %v636
        %638 = vmatpush1.xpose.msra.mxu0 %v637
        %639 = vmatprep.subr.mxu0 0.0
        %v640 = vand.u32 %v342, 4294901760
        %v641 = vsub.f32 %v342, %v640
        %642 = vmatpush1.xpose.msra.mxu0 %v641
        %643 = vmatprep.subr.mxu0 0.0
        %644 = vmatpush1.xpose.msra.mxu0 0.0
        %645 = vmatprep.subr.mxu0 0.0
        %646 = vmatpush1.xpose.msra.mxu0 0.0
        %647 = vmatprep.subr.mxu0 0.0
        %648 = vmatpush1.xpose.msra.mxu0 0.0
        %649 = vmatprep.subr.mxu0 0.0
        %650 = vmatpush1.xpose.msra.mxu0 0.0
        %651 = vmatprep.subr.mxu0 0.0
        %652 = vmatpush1.xpose.msra.mxu0 0.0
        %653 = vmatprep.subr.mxu0 0.0
        %654 = vmatpush1.xpose.msra.mxu0 0.0
        %655 = vmatprep.subr.mxu0 0.0
        %656 = vmatpush1.xpose.msra.mxu0 0.0
        %657 = vmatprep.subr.mxu0 0.0
        %658 = vmatpush1.xpose.msra.mxu0 0.0
        %659 = vmatprep.subr.mxu0 0.0
        %660 = vmatpush1.xpose.msra.mxu0 0.0
        %661 = vmatprep.subr.mxu0 0.0
        %662 = vmatpush1.xpose.msra.mxu0 0.0
        %663 = vmatprep.subr.mxu0 0.0
        %664 = vmatpush1.xpose.msra.mxu0 0.0
        %665 = vmatprep.subr.mxu0 0.0
        %666 = vmatpush1.xpose.msra.mxu0 0.0
        %667 = vmatprep.subr.mxu0 0.0
        %668 = vmatpush1.xpose.msra.mxu0 0.0
        %669 = vmatprep.subr.mxu0 0.0
        %670 = vmatpush1.xpose.msra.mxu0 0.0
        %671 = vmatprep.subr.mxu0 0.0
        %672 = vmatpush1.xpose.msra.mxu0 0.0
        %673 = vmatprep.subr.mxu0 0.0
        %674 = vmatpush1.xpose.msra.mxu0 0.0
        %675 = vmatprep.mubr.f32.mxu0 0.0
        %676 = vmatmul.mubr.f32.gmra.mrb[0].mxu0 0.0
        %v677 = vpop.f32.mrb[0].mxu0
        %v678 = vadd.f32 %v576, %v677
        %v679 = vpop.f32.mrb[0].mxu0
        %680 = vdwg.mxu0
        %681 = vmatprep.subr.mxu0 0.0
        %v682 = vand.u32 %v327, 4294901760
        %683 = vmatpush1.xpose.msra.mxu0 %v682
        %684 = vmatprep.subr.mxu0 0.0
        %v685 = vand.u32 %v328, 4294901760
        %686 = vmatpush1.xpose.msra.mxu0 %v685
        %687 = vmatprep.subr.mxu0 0.0
        %v688 = vand.u32 %v329, 4294901760
        %689 = vmatpush1.xpose.msra.mxu0 %v688
        %690 = vmatprep.subr.mxu0 0.0
        %v691 = vand.u32 %v330, 4294901760
        %692 = vmatpush1.xpose.msra.mxu0 %v691
        %693 = vmatprep.subr.mxu0 0.0
        %v694 = vand.u32 %v331, 4294901760
        %695 = vmatpush1.xpose.msra.mxu0 %v694
        %696 = vmatprep.subr.mxu0 0.0
        %v697 = vand.u32 %v332, 4294901760
        %698 = vmatpush1.xpose.msra.mxu0 %v697
        %699 = vmatprep.subr.mxu0 0.0
        %v700 = vand.u32 %v333, 4294901760
        %701 = vmatpush1.xpose.msra.mxu0 %v700
        %702 = vmatprep.subr.mxu0 0.0
        %v703 = vand.u32 %v334, 4294901760
        %704 = vmatpush1.xpose.msra.mxu0 %v703
        %705 = vmatprep.subr.mxu0 0.0
        %v706 = vand.u32 %v335, 4294901760
        %707 = vmatpush1.xpose.msra.mxu0 %v706
        %708 = vmatprep.subr.mxu0 0.0
        %v709 = vand.u32 %v336, 4294901760
        %710 = vmatpush1.xpose.msra.mxu0 %v709
        %711 = vmatprep.subr.mxu0 0.0
        %v712 = vand.u32 %v337, 4294901760
        %713 = vmatpush1.xpose.msra.mxu0 %v712
        %714 = vmatprep.subr.mxu0 0.0
        %v715 = vand.u32 %v338, 4294901760
        %716 = vmatpush1.xpose.msra.mxu0 %v715
        %717 = vmatprep.subr.mxu0 0.0
        %v718 = vand.u32 %v339, 4294901760
        %719 = vmatpush1.xpose.msra.mxu0 %v718
        %720 = vmatprep.subr.mxu0 0.0
        %v721 = vand.u32 %v340, 4294901760
        %722 = vmatpush1.xpose.msra.mxu0 %v721
        %723 = vmatprep.subr.mxu0 0.0
        %v724 = vand.u32 %v341, 4294901760
        %725 = vmatpush1.xpose.msra.mxu0 %v724
        %726 = vmatprep.subr.mxu0 0.0
        %v727 = vand.u32 %v342, 4294901760
        %728 = vmatpush1.xpose.msra.mxu0 %v727
        %729 = vmatprep.subr.mxu0 0.0
        %730 = vmatpush1.xpose.msra.mxu0 0.0
        %731 = vmatprep.subr.mxu0 0.0
        %732 = vmatpush1.xpose.msra.mxu0 0.0
        %733 = vmatprep.subr.mxu0 0.0
        %734 = vmatpush1.xpose.msra.mxu0 0.0
        %735 = vmatprep.subr.mxu0 0.0
        %736 = vmatpush1.xpose.msra.mxu0 0.0
        %737 = vmatprep.subr.mxu0 0.0
        %738 = vmatpush1.xpose.msra.mxu0 0.0
        %739 = vmatprep.subr.mxu0 0.0
        %740 = vmatpush1.xpose.msra.mxu0 0.0
        %741 = vmatprep.subr.mxu0 0.0
        %742 = vmatpush1.xpose.msra.mxu0 0.0
        %743 = vmatprep.subr.mxu0 0.0
        %744 = vmatpush1.xpose.msra.mxu0 0.0
        %745 = vmatprep.subr.mxu0 0.0
        %746 = vmatpush1.xpose.msra.mxu0 0.0
        %747 = vmatprep.subr.mxu0 0.0
        %748 = vmatpush1.xpose.msra.mxu0 0.0
        %749 = vmatprep.subr.mxu0 0.0
        %750 = vmatpush1.xpose.msra.mxu0 0.0
        %751 = vmatprep.subr.mxu0 0.0
        %752 = vmatpush1.xpose.msra.mxu0 0.0
        %753 = vmatprep.subr.mxu0 0.0
        %754 = vmatpush1.xpose.msra.mxu0 0.0
        %755 = vmatprep.subr.mxu0 0.0
        %756 = vmatpush1.xpose.msra.mxu0 0.0
        %757 = vmatprep.subr.mxu0 0.0
        %758 = vmatpush1.xpose.msra.mxu0 0.0
        %759 = vmatprep.subr.mxu0 0.0
        %760 = vmatpush1.xpose.msra.mxu0 0.0
        %761 = vmatprep.mubr.f32.mxu0 0.0
        %762 = vmatmul.mubr.f32.gmra.mrb[0].mxu0 0.0
        %v763 = vpop.f32.mrb[0].mxu0
        %v764 = vadd.f32 %v678, %v763
        %v765 = vpop.f32.mrb[0].mxu0
        %766 = vdwg.mxu0
        %767 = vmatprep.subr.mxu0 0.0
        %v768 = vand.u32 %v327, 4294901760
        %v769 = vsub.f32 %v327, %v768
        %v770 = vand.u32 %v769, 4294901760
        %771 = vmatpush1.xpose.msra.mxu0 %v770
        %772 = vmatprep.subr.mxu0 0.0
        %v773 = vand.u32 %v328, 4294901760
        %v774 = vsub.f32 %v328, %v773
        %v775 = vand.u32 %v774, 4294901760
        %776 = vmatpush1.xpose.msra.mxu0 %v775
        %777 = vmatprep.subr.mxu0 0.0
        %v778 = vand.u32 %v329, 4294901760
        %v779 = vsub.f32 %v329, %v778
        %v780 = vand.u32 %v779, 4294901760
        %781 = vmatpush1.xpose.msra.mxu0 %v780
        %782 = vmatprep.subr.mxu0 0.0
        %v783 = vand.u32 %v330, 4294901760
        %v784 = vsub.f32 %v330, %v783
        %v785 = vand.u32 %v784, 4294901760
        %786 = vmatpush1.xpose.msra.mxu0 %v785
        %787 = vmatprep.subr.mxu0 0.0
        %v788 = vand.u32 %v331, 4294901760
        %v789 = vsub.f32 %v331, %v788
        %v790 = vand.u32 %v789, 4294901760
        %791 = vmatpush1.xpose.msra.mxu0 %v790
        %792 = vmatprep.subr.mxu0 0.0
        %v793 = vand.u32 %v332, 4294901760
        %v794 = vsub.f32 %v332, %v793
        %v795 = vand.u32 %v794, 4294901760
        %796 = vmatpush1.xpose.msra.mxu0 %v795
        %797 = vmatprep.subr.mxu0 0.0
        %v798 = vand.u32 %v333, 4294901760
        %v799 = vsub.f32 %v333, %v798
        %v800 = vand.u32 %v799, 4294901760
        %801 = vmatpush1.xpose.msra.mxu0 %v800
        %802 = vmatprep.subr.mxu0 0.0
        %v803 = vand.u32 %v334, 4294901760
        %v804 = vsub.f32 %v334, %v803
        %v805 = vand.u32 %v804, 4294901760
        %806 = vmatpush1.xpose.msra.mxu0 %v805
        %807 = vmatprep.subr.mxu0 0.0
        %v808 = vand.u32 %v335, 4294901760
        %v809 = vsub.f32 %v335, %v808
        %v810 = vand.u32 %v809, 4294901760
        %811 = vmatpush1.xpose.msra.mxu0 %v810
        %812 = vmatprep.subr.mxu0 0.0
        %v813 = vand.u32 %v336, 4294901760
        %v814 = vsub.f32 %v336, %v813
        %v815 = vand.u32 %v814, 4294901760
        %816 = vmatpush1.xpose.msra.mxu0 %v815
        %817 = vmatprep.subr.mxu0 0.0
        %v818 = vand.u32 %v337, 4294901760
        %v819 = vsub.f32 %v337, %v818
        %v820 = vand.u32 %v819, 4294901760
        %821 = vmatpush1.xpose.msra.mxu0 %v820
        %822 = vmatprep.subr.mxu0 0.0
        %v823 = vand.u32 %v338, 4294901760
        %v824 = vsub.f32 %v338, %v823
        %v825 = vand.u32 %v824, 4294901760
        %826 = vmatpush1.xpose.msra.mxu0 %v825
        %827 = vmatprep.subr.mxu0 0.0
        %v828 = vand.u32 %v339, 4294901760
        %v829 = vsub.f32 %v339, %v828
        %v830 = vand.u32 %v829, 4294901760
        %831 = vmatpush1.xpose.msra.mxu0 %v830
        %832 = vmatprep.subr.mxu0 0.0
        %v833 = vand.u32 %v340, 4294901760
        %v834 = vsub.f32 %v340, %v833
        %v835 = vand.u32 %v834, 4294901760
        %836 = vmatpush1.xpose.msra.mxu0 %v835
        %837 = vmatprep.subr.mxu0 0.0
        %v838 = vand.u32 %v341, 4294901760
        %v839 = vsub.f32 %v341, %v838
        %v840 = vand.u32 %v839, 4294901760
        %841 = vmatpush1.xpose.msra.mxu0 %v840
        %842 = vmatprep.subr.mxu0 0.0
        %v843 = vand.u32 %v342, 4294901760
        %v844 = vsub.f32 %v342, %v843
        %v845 = vand.u32 %v844, 4294901760
        %846 = vmatpush1.xpose.msra.mxu0 %v845
        %847 = vmatprep.subr.mxu0 0.0
        %848 = vmatpush1.xpose.msra.mxu0 0.0
        %849 = vmatprep.subr.mxu0 0.0
        %850 = vmatpush1.xpose.msra.mxu0 0.0
        %851 = vmatprep.subr.mxu0 0.0
        %852 = vmatpush1.xpose.msra.mxu0 0.0
        %853 = vmatprep.subr.mxu0 0.0
        %854 = vmatpush1.xpose.msra.mxu0 0.0
        %855 = vmatprep.subr.mxu0 0.0
        %856 = vmatpush1.xpose.msra.mxu0 0.0
        %857 = vmatprep.subr.mxu0 0.0
        %858 = vmatpush1.xpose.msra.mxu0 0.0
        %859 = vmatprep.subr.mxu0 0.0
        %860 = vmatpush1.xpose.msra.mxu0 0.0
        %861 = vmatprep.subr.mxu0 0.0
        %862 = vmatpush1.xpose.msra.mxu0 0.0
        %863 = vmatprep.subr.mxu0 0.0
        %864 = vmatpush1.xpose.msra.mxu0 0.0
        %865 = vmatprep.subr.mxu0 0.0
        %866 = vmatpush1.xpose.msra.mxu0 0.0
        %867 = vmatprep.subr.mxu0 0.0
        %868 = vmatpush1.xpose.msra.mxu0 0.0
        %869 = vmatprep.subr.mxu0 0.0
        %870 = vmatpush1.xpose.msra.mxu0 0.0
        %871 = vmatprep.subr.mxu0 0.0
        %872 = vmatpush1.xpose.msra.mxu0 0.0
        %873 = vmatprep.subr.mxu0 0.0
        %874 = vmatpush1.xpose.msra.mxu0 0.0
        %875 = vmatprep.subr.mxu0 0.0
        %876 = vmatpush1.xpose.msra.mxu0 0.0
        %877 = vmatprep.subr.mxu0 0.0
        %878 = vmatpush1.xpose.msra.mxu0 0.0
        %879 = vmatprep.mubr.f32.mxu0 0.0
        %880 = vmatmul.mubr.f32.gmra.mrb[0].mxu0 1.0
        %v881 = vpop.f32.mrb[0].mxu0
        %v882 = vadd.f32 %v764, %v881
        %v883 = vpop.f32.mrb[0].mxu0
        %884 = vdwg.mxu0
        %885 = vmatprep.subr.mxu0 0.0
        %v886 = vand.u32 %v327, 4294901760
        %887 = vmatpush1.xpose.msra.mxu0 %v886
        %888 = vmatprep.subr.mxu0 0.0
        %v889 = vand.u32 %v328, 4294901760
        %890 = vmatpush1.xpose.msra.mxu0 %v889
        %891 = vmatprep.subr.mxu0 0.0
        %v892 = vand.u32 %v329, 4294901760
        %893 = vmatpush1.xpose.msra.mxu0 %v892
        %894 = vmatprep.subr.mxu0 0.0
        %v895 = vand.u32 %v330, 4294901760
        %896 = vmatpush1.xpose.msra.mxu0 %v895
        %897 = vmatprep.subr.mxu0 0.0
        %v898 = vand.u32 %v331, 4294901760
        %899 = vmatpush1.xpose.msra.mxu0 %v898
        %900 = vmatprep.subr.mxu0 0.0
        %v901 = vand.u32 %v332, 4294901760
        %902 = vmatpush1.xpose.msra.mxu0 %v901
        %903 = vmatprep.subr.mxu0 0.0
        %v904 = vand.u32 %v333, 4294901760
        %905 = vmatpush1.xpose.msra.mxu0 %v904
        %906 = vmatprep.subr.mxu0 0.0
        %v907 = vand.u32 %v334, 4294901760
        %908 = vmatpush1.xpose.msra.mxu0 %v907
        %909 = vmatprep.subr.mxu0 0.0
        %v910 = vand.u32 %v335, 4294901760
        %911 = vmatpush1.xpose.msra.mxu0 %v910
        %912 = vmatprep.subr.mxu0 0.0
        %v913 = vand.u32 %v336, 4294901760
        %914 = vmatpush1.xpose.msra.mxu0 %v913
        %915 = vmatprep.subr.mxu0 0.0
        %v916 = vand.u32 %v337, 4294901760
        %917 = vmatpush1.xpose.msra.mxu0 %v916
        %918 = vmatprep.subr.mxu0 0.0
        %v919 = vand.u32 %v338, 4294901760
        %920 = vmatpush1.xpose.msra.mxu0 %v919
        %921 = vmatprep.subr.mxu0 0.0
        %v922 = vand.u32 %v339, 4294901760
        %923 = vmatpush1.xpose.msra.mxu0 %v922
        %924 = vmatprep.subr.mxu0 0.0
        %v925 = vand.u32 %v340, 4294901760
        %926 = vmatpush1.xpose.msra.mxu0 %v925
        %927 = vmatprep.subr.mxu0 0.0
        %v928 = vand.u32 %v341, 4294901760
        %929 = vmatpush1.xpose.msra.mxu0 %v928
        %930 = vmatprep.subr.mxu0 0.0
        %v931 = vand.u32 %v342, 4294901760
        %932 = vmatpush1.xpose.msra.mxu0 %v931
        %933 = vmatprep.subr.mxu0 0.0
        %934 = vmatpush1.xpose.msra.mxu0 0.0
        %935 = vmatprep.subr.mxu0 0.0
        %936 = vmatpush1.xpose.msra.mxu0 0.0
        %937 = vmatprep.subr.mxu0 0.0
        %938 = vmatpush1.xpose.msra.mxu0 0.0
        %939 = vmatprep.subr.mxu0 0.0
        %940 = vmatpush1.xpose.msra.mxu0 0.0
        %941 = vmatprep.subr.mxu0 0.0
        %942 = vmatpush1.xpose.msra.mxu0 0.0
        %943 = vmatprep.subr.mxu0 0.0
        %944 = vmatpush1.xpose.msra.mxu0 0.0
        %945 = vmatprep.subr.mxu0 0.0
        %946 = vmatpush1.xpose.msra.mxu0 0.0
        %947 = vmatprep.subr.mxu0 0.0
        %948 = vmatpush1.xpose.msra.mxu0 0.0
        %949 = vmatprep.subr.mxu0 0.0
        %950 = vmatpush1.xpose.msra.mxu0 0.0
        %951 = vmatprep.subr.mxu0 0.0
        %952 = vmatpush1.xpose.msra.mxu0 0.0
        %953 = vmatprep.subr.mxu0 0.0
        %954 = vmatpush1.xpose.msra.mxu0 0.0
        %955 = vmatprep.subr.mxu0 0.0
        %956 = vmatpush1.xpose.msra.mxu0 0.0
        %957 = vmatprep.subr.mxu0 0.0
        %958 = vmatpush1.xpose.msra.mxu0 0.0
        %959 = vmatprep.subr.mxu0 0.0
        %960 = vmatpush1.xpose.msra.mxu0 0.0
        %961 = vmatprep.subr.mxu0 0.0
        %962 = vmatpush1.xpose.msra.mxu0 0.0
        %963 = vmatprep.subr.mxu0 0.0
        %964 = vmatpush1.xpose.msra.mxu0 0.0
        %965 = vmatprep.mubr.f32.mxu0 0.0
        %966 = vmatmul.mubr.f32.gmra.mrb[0].mxu0 1.0
        %v967 = vpop.f32.mrb[0].mxu0
        %v968 = vadd.f32 %v882, %v967
        %v969 = vpop.f32.mrb[0].mxu0
        %970 = vdwg.mxu0
        %v971 = vmax.f32 %v968, 1e-08
        %v972 = vrsqrt.pop %v971
        %973 = vmatprep.subr.mxu0 0.0
        %v974 = vand.u32 %v311, 4294901760
        %975 = vmatpush1.xpose.msra.mxu0 %v974
        %976 = vmatprep.subr.mxu0 0.0
        %v977 = vand.u32 %v312, 4294901760
        %978 = vmatpush1.xpose.msra.mxu0 %v977
        %979 = vmatprep.subr.mxu0 0.0
        %v980 = vand.u32 %v313, 4294901760
        %981 = vmatpush1.xpose.msra.mxu0 %v980
        %982 = vmatprep.subr.mxu0 0.0
        %v983 = vand.u32 %v314, 4294901760
        %984 = vmatpush1.xpose.msra.mxu0 %v983
        %985 = vmatprep.subr.mxu0 0.0
        %v986 = vand.u32 %v315, 4294901760
        %987 = vmatpush1.xpose.msra.mxu0 %v986
        %988 = vmatprep.subr.mxu0 0.0
        %v989 = vand.u32 %v316, 4294901760
        %990 = vmatpush1.xpose.msra.mxu0 %v989
        %991 = vmatprep.subr.mxu0 0.0
        %v992 = vand.u32 %v317, 4294901760
        %993 = vmatpush1.xpose.msra.mxu0 %v992
        %994 = vmatprep.subr.mxu0 0.0
        %v995 = vand.u32 %v318, 4294901760
        %996 = vmatpush1.xpose.msra.mxu0 %v995
        %997 = vmatprep.subr.mxu0 0.0
        %v998 = vand.u32 %v319, 4294901760
        %999 = vmatpush1.xpose.msra.mxu0 %v998
        %1000 = vmatprep.subr.mxu0 0.0
        %v1001 = vand.u32 %v320, 4294901760
        %1002 = vmatpush1.xpose.msra.mxu0 %v1001
        %1003 = vmatprep.subr.mxu0 0.0
        %v1004 = vand.u32 %v321, 4294901760
        %1005 = vmatpush1.xpose.msra.mxu0 %v1004
        %1006 = vmatprep.subr.mxu0 0.0
        %v1007 = vand.u32 %v322, 4294901760
        %1008 = vmatpush1.xpose.msra.mxu0 %v1007
        %1009 = vmatprep.subr.mxu0 0.0
        %v1010 = vand.u32 %v323, 4294901760
        %1011 = vmatpush1.xpose.msra.mxu0 %v1010
        %1012 = vmatprep.subr.mxu0 0.0
        %v1013 = vand.u32 %v324, 4294901760
        %1014 = vmatpush1.xpose.msra.mxu0 %v1013
        %1015 = vmatprep.subr.mxu0 0.0
        %v1016 = vand.u32 %v325, 4294901760
        %1017 = vmatpush1.xpose.msra.mxu0 %v1016
        %1018 = vmatprep.subr.mxu0 0.0
        %v1019 = vand.u32 %v326, 4294901760
        %1020 = vmatpush1.xpose.msra.mxu0 %v1019
        %1021 = vmatprep.subr.mxu0 0.0
        %1022 = vmatpush1.xpose.msra.mxu0 0.0
        %1023 = vmatprep.subr.mxu0 0.0
        %1024 = vmatpush1.xpose.msra.mxu0 0.0
        %1025 = vmatprep.subr.mxu0 0.0
        %1026 = vmatpush1.xpose.msra.mxu0 0.0
        %1027 = vmatprep.subr.mxu0 0.0
        %1028 = vmatpush1.xpose.msra.mxu0 0.0
        %1029 = vmatprep.subr.mxu0 0.0
        %1030 = vmatpush1.xpose.msra.mxu0 0.0
        %1031 = vmatprep.subr.mxu0 0.0
        %1032 = vmatpush1.xpose.msra.mxu0 0.0
        %1033 = vmatprep.subr.mxu0 0.0
        %1034 = vmatpush1.xpose.msra.mxu0 0.0
        %1035 = vmatprep.subr.mxu0 0.0
        %1036 = vmatpush1.xpose.msra.mxu0 0.0
        %1037 = vmatprep.subr.mxu0 0.0
        %1038 = vmatpush1.xpose.msra.mxu0 0.0
        %1039 = vmatprep.subr.mxu0 0.0
        %1040 = vmatpush1.xpose.msra.mxu0 0.0
        %1041 = vmatprep.subr.mxu0 0.0
        %1042 = vmatpush1.xpose.msra.mxu0 0.0
        %1043 = vmatprep.subr.mxu0 0.0
        %1044 = vmatpush1.xpose.msra.mxu0 0.0
        %1045 = vmatprep.subr.mxu0 0.0
        %1046 = vmatpush1.xpose.msra.mxu0 0.0
        %1047 = vmatprep.subr.mxu0 0.0
        %1048 = vmatpush1.xpose.msra.mxu0 0.0
        %1049 = vmatprep.subr.mxu0 0.0
        %1050 = vmatpush1.xpose.msra.mxu0 0.0
        %1051 = vmatprep.subr.mxu0 0.0
        %1052 = vmatpush1.xpose.msra.mxu0 0.0
        %1053 = vmatprep.mubr.f32.mxu0 0.0
        %v1054 = vand.u32 %v310, 4294901760
        %v1055 = vsub.f32 %v310, %v1054
        %v1056 = vand.u32 %v1055, 4294901760
        %v1057 = vsub.f32 %v1055, %v1056
        %v1058 = vand.u32 %v1057, 4294901760
        %1059 = vmatmul.mubr.f32.gmra.mrb[0].mxu0 %v1058
        %v1060 = vpop.f32.mrb[0].mxu0
        %v1061 = vadd.f32 0.0, %v1060
        %v1062 = vpop.f32.mrb[0].mxu0
        %1063 = vdwg.mxu0
        %1064 = vmatprep.subr.mxu0 0.0
        %v1065 = vand.u32 %v311, 4294901760
        %v1066 = vsub.f32 %v311, %v1065
        %v1067 = vand.u32 %v1066, 4294901760
        %v1068 = vsub.f32 %v1066, %v1067
        %v1069 = vand.u32 %v1068, 4294901760
        %1070 = vmatpush1.xpose.msra.mxu0 %v1069
        %1071 = vmatprep.subr.mxu0 0.0
        %v1072 = vand.u32 %v312, 4294901760
        %v1073 = vsub.f32 %v312, %v1072
        %v1074 = vand.u32 %v1073, 4294901760
        %v1075 = vsub.f32 %v1073, %v1074
        %v1076 = vand.u32 %v1075, 4294901760
        %1077 = vmatpush1.xpose.msra.mxu0 %v1076
        %1078 = vmatprep.subr.mxu0 0.0
        %v1079 = vand.u32 %v313, 4294901760
        %v1080 = vsub.f32 %v313, %v1079
        %v1081 = vand.u32 %v1080, 4294901760
        %v1082 = vsub.f32 %v1080, %v1081
        %v1083 = vand.u32 %v1082, 4294901760
        %1084 = vmatpush1.xpose.msra.mxu0 %v1083
        %1085 = vmatprep.subr.mxu0 0.0
        %v1086 = vand.u32 %v314, 4294901760
        %v1087 = vsub.f32 %v314, %v1086
        %v1088 = vand.u32 %v1087, 4294901760
        %v1089 = vsub.f32 %v1087, %v1088
        %v1090 = vand.u32 %v1089, 4294901760
        %1091 = vmatpush1.xpose.msra.mxu0 %v1090
        %1092 = vmatprep.subr.mxu0 0.0
        %v1093 = vand.u32 %v315, 4294901760
        %v1094 = vsub.f32 %v315, %v1093
        %v1095 = vand.u32 %v1094, 4294901760
        %v1096 = vsub.f32 %v1094, %v1095
        %v1097 = vand.u32 %v1096, 4294901760
        %1098 = vmatpush1.xpose.msra.mxu0 %v1097
        %1099 = vmatprep.subr.mxu0 0.0
        %v1100 = vand.u32 %v316, 4294901760
        %v1101 = vsub.f32 %v316, %v1100
        %v1102 = vand.u32 %v1101, 4294901760
        %v1103 = vsub.f32 %v1101, %v1102
        %v1104 = vand.u32 %v1103, 4294901760
        %1105 = vmatpush1.xpose.msra.mxu0 %v1104
        %1106 = vmatprep.subr.mxu0 0.0
        %v1107 = vand.u32 %v317, 4294901760
        %v1108 = vsub.f32 %v317, %v1107
        %v1109 = vand.u32 %v1108, 4294901760
        %v1110 = vsub.f32 %v1108, %v1109
        %v1111 = vand.u32 %v1110, 4294901760
        %1112 = vmatpush1.xpose.msra.mxu0 %v1111
        %1113 = vmatprep.subr.mxu0 0.0
        %v1114 = vand.u32 %v318, 4294901760
        %v1115 = vsub.f32 %v318, %v1114
        %v1116 = vand.u32 %v1115, 4294901760
        %v1117 = vsub.f32 %v1115, %v1116
        %v1118 = vand.u32 %v1117, 4294901760
        %1119 = vmatpush1.xpose.msra.mxu0 %v1118
        %1120 = vmatprep.subr.mxu0 0.0
        %v1121 = vand.u32 %v319, 4294901760
        %v1122 = vsub.f32 %v319, %v1121
        %v1123 = vand.u32 %v1122, 4294901760
        %v1124 = vsub.f32 %v1122, %v1123
        %v1125 = vand.u32 %v1124, 4294901760
        %1126 = vmatpush1.xpose.msra.mxu0 %v1125
        %1127 = vmatprep.subr.mxu0 0.0
        %v1128 = vand.u32 %v320, 4294901760
        %v1129 = vsub.f32 %v320, %v1128
        %v1130 = vand.u32 %v1129, 4294901760
        %v1131 = vsub.f32 %v1129, %v1130
        %v1132 = vand.u32 %v1131, 4294901760
        %1133 = vmatpush1.xpose.msra.mxu0 %v1132
        %1134 = vmatprep.subr.mxu0 0.0
        %v1135 = vand.u32 %v321, 4294901760
        %v1136 = vsub.f32 %v321, %v1135
        %v1137 = vand.u32 %v1136, 4294901760
        %v1138 = vsub.f32 %v1136, %v1137
        %v1139 = vand.u32 %v1138, 4294901760
        %1140 = vmatpush1.xpose.msra.mxu0 %v1139
        %1141 = vmatprep.subr.mxu0 0.0
        %v1142 = vand.u32 %v322, 4294901760
        %v1143 = vsub.f32 %v322, %v1142
        %v1144 = vand.u32 %v1143, 4294901760
        %v1145 = vsub.f32 %v1143, %v1144
        %v1146 = vand.u32 %v1145, 4294901760
        %1147 = vmatpush1.xpose.msra.mxu0 %v1146
        %1148 = vmatprep.subr.mxu0 0.0
        %v1149 = vand.u32 %v323, 4294901760
        %v1150 = vsub.f32 %v323, %v1149
        %v1151 = vand.u32 %v1150, 4294901760
        %v1152 = vsub.f32 %v1150, %v1151
        %v1153 = vand.u32 %v1152, 4294901760
        %1154 = vmatpush1.xpose.msra.mxu0 %v1153
        %1155 = vmatprep.subr.mxu0 0.0
        %v1156 = vand.u32 %v324, 4294901760
        %v1157 = vsub.f32 %v324, %v1156
        %v1158 = vand.u32 %v1157, 4294901760
        %v1159 = vsub.f32 %v1157, %v1158
        %v1160 = vand.u32 %v1159, 4294901760
        %1161 = vmatpush1.xpose.msra.mxu0 %v1160
        %1162 = vmatprep.subr.mxu0 0.0
        %v1163 = vand.u32 %v325, 4294901760
        %v1164 = vsub.f32 %v325, %v1163
        %v1165 = vand.u32 %v1164, 4294901760
        %v1166 = vsub.f32 %v1164, %v1165
        %v1167 = vand.u32 %v1166, 4294901760
        %1168 = vmatpush1.xpose.msra.mxu0 %v1167
        %1169 = vmatprep.subr.mxu0 0.0
        %v1170 = vand.u32 %v326, 4294901760
        %v1171 = vsub.f32 %v326, %v1170
        %v1172 = vand.u32 %v1171, 4294901760
        %v1173 = vsub.f32 %v1171, %v1172
        %v1174 = vand.u32 %v1173, 4294901760
        %1175 = vmatpush1.xpose.msra.mxu0 %v1174
        %1176 = vmatprep.subr.mxu0 0.0
        %1177 = vmatpush1.xpose.msra.mxu0 0.0
        %1178 = vmatprep.subr.mxu0 0.0
        %1179 = vmatpush1.xpose.msra.mxu0 0.0
        %1180 = vmatprep.subr.mxu0 0.0
        %1181 = vmatpush1.xpose.msra.mxu0 0.0
        %1182 = vmatprep.subr.mxu0 0.0
        %1183 = vmatpush1.xpose.msra.mxu0 0.0
        %1184 = vmatprep.subr.mxu0 0.0
        %1185 = vmatpush1.xpose.msra.mxu0 0.0
        %1186 = vmatprep.subr.mxu0 0.0
        %1187 = vmatpush1.xpose.msra.mxu0 0.0
        %1188 = vmatprep.subr.mxu0 0.0
        %1189 = vmatpush1.xpose.msra.mxu0 0.0
        %1190 = vmatprep.subr.mxu0 0.0
        %1191 = vmatpush1.xpose.msra.mxu0 0.0
        %1192 = vmatprep.subr.mxu0 0.0
        %1193 = vmatpush1.xpose.msra.mxu0 0.0
        %1194 = vmatprep.subr.mxu0 0.0
        %1195 = vmatpush1.xpose.msra.mxu0 0.0
        %1196 = vmatprep.subr.mxu0 0.0
        %1197 = vmatpush1.xpose.msra.mxu0 0.0
        %1198 = vmatprep.subr.mxu0 0.0
        %1199 = vmatpush1.xpose.msra.mxu0 0.0
        %1200 = vmatprep.subr.mxu0 0.0
        %1201 = vmatpush1.xpose.msra.mxu0 0.0
        %1202 = vmatprep.subr.mxu0 0.0
        %1203 = vmatpush1.xpose.msra.mxu0 0.0
        %1204 = vmatprep.subr.mxu0 0.0
        %1205 = vmatpush1.xpose.msra.mxu0 0.0
        %1206 = vmatprep.subr.mxu0 0.0
        %1207 = vmatpush1.xpose.msra.mxu0 0.0
        %1208 = vmatprep.mubr.f32.mxu0 0.0
        %v1209 = vand.u32 %v310, 4294901760
        %1210 = vmatmul.mubr.f32.gmra.mrb[0].mxu0 %v1209
        %v1211 = vpop.f32.mrb[0].mxu0
        %v1212 = vadd.f32 %v1061, %v1211
        %v1213 = vpop.f32.mrb[0].mxu0
        %1214 = vdwg.mxu0
        %1215 = vmatprep.subr.mxu0 0.0
        %v1216 = vand.u32 %v311, 4294901760
        %v1217 = vsub.f32 %v311, %v1216
        %1218 = vmatpush1.xpose.msra.mxu0 %v1217
        %1219 = vmatprep.subr.mxu0 0.0
        %v1220 = vand.u32 %v312, 4294901760
        %v1221 = vsub.f32 %v312, %v1220
        %1222 = vmatpush1.xpose.msra.mxu0 %v1221
        %1223 = vmatprep.subr.mxu0 0.0
        %v1224 = vand.u32 %v313, 4294901760
        %v1225 = vsub.f32 %v313, %v1224
        %1226 = vmatpush1.xpose.msra.mxu0 %v1225
        %1227 = vmatprep.subr.mxu0 0.0
        %v1228 = vand.u32 %v314, 4294901760
        %v1229 = vsub.f32 %v314, %v1228
        %1230 = vmatpush1.xpose.msra.mxu0 %v1229
        %1231 = vmatprep.subr.mxu0 0.0
        %v1232 = vand.u32 %v315, 4294901760
        %v1233 = vsub.f32 %v315, %v1232
        %1234 = vmatpush1.xpose.msra.mxu0 %v1233
        %1235 = vmatprep.subr.mxu0 0.0
        %v1236 = vand.u32 %v316, 4294901760
        %v1237 = vsub.f32 %v316, %v1236
        %1238 = vmatpush1.xpose.msra.mxu0 %v1237
        %1239 = vmatprep.subr.mxu0 0.0
        %v1240 = vand.u32 %v317, 4294901760
        %v1241 = vsub.f32 %v317, %v1240
        %1242 = vmatpush1.xpose.msra.mxu0 %v1241
        %1243 = vmatprep.subr.mxu0 0.0
        %v1244 = vand.u32 %v318, 4294901760
        %v1245 = vsub.f32 %v318, %v1244
        %1246 = vmatpush1.xpose.msra.mxu0 %v1245
        %1247 = vmatprep.subr.mxu0 0.0
        %v1248 = vand.u32 %v319, 4294901760
        %v1249 = vsub.f32 %v319, %v1248
        %1250 = vmatpush1.xpose.msra.mxu0 %v1249
        %1251 = vmatprep.subr.mxu0 0.0
        %v1252 = vand.u32 %v320, 4294901760
        %v1253 = vsub.f32 %v320, %v1252
        %1254 = vmatpush1.xpose.msra.mxu0 %v1253
        %1255 = vmatprep.subr.mxu0 0.0
        %v1256 = vand.u32 %v321, 4294901760
        %v1257 = vsub.f32 %v321, %v1256
        %1258 = vmatpush1.xpose.msra.mxu0 %v1257
        %1259 = vmatprep.subr.mxu0 0.0
        %v1260 = vand.u32 %v322, 4294901760
        %v1261 = vsub.f32 %v322, %v1260
        %1262 = vmatpush1.xpose.msra.mxu0 %v1261
        %1263 = vmatprep.subr.mxu0 0.0
        %v1264 = vand.u32 %v323, 4294901760
        %v1265 = vsub.f32 %v323, %v1264
        %1266 = vmatpush1.xpose.msra.mxu0 %v1265
        %1267 = vmatprep.subr.mxu0 0.0
        %v1268 = vand.u32 %v324, 4294901760
        %v1269 = vsub.f32 %v324, %v1268
        %1270 = vmatpush1.xpose.msra.mxu0 %v1269
        %1271 = vmatprep.subr.mxu0 0.0
        %v1272 = vand.u32 %v325, 4294901760
        %v1273 = vsub.f32 %v325, %v1272
        %1274 = vmatpush1.xpose.msra.mxu0 %v1273
        %1275 = vmatprep.subr.mxu0 0.0
        %v1276 = vand.u32 %v326, 4294901760
        %v1277 = vsub.f32 %v326, %v1276
        %1278 = vmatpush1.xpose.msra.mxu0 %v1277
        %1279 = vmatprep.subr.mxu0 0.0
        %1280 = vmatpush1.xpose.msra.mxu0 0.0
        %1281 = vmatprep.subr.mxu0 0.0
        %1282 = vmatpush1.xpose.msra.mxu0 0.0
        %1283 = vmatprep.subr.mxu0 0.0
        %1284 = vmatpush1.xpose.msra.mxu0 0.0
        %1285 = vmatprep.subr.mxu0 0.0
        %1286 = vmatpush1.xpose.msra.mxu0 0.0
        %1287 = vmatprep.subr.mxu0 0.0
        %1288 = vmatpush1.xpose.msra.mxu0 0.0
        %1289 = vmatprep.subr.mxu0 0.0
        %1290 = vmatpush1.xpose.msra.mxu0 0.0
        %1291 = vmatprep.subr.mxu0 0.0
        %1292 = vmatpush1.xpose.msra.mxu0 0.0
        %1293 = vmatprep.subr.mxu0 0.0
        %1294 = vmatpush1.xpose.msra.mxu0 0.0
        %1295 = vmatprep.subr.mxu0 0.0
        %1296 = vmatpush1.xpose.msra.mxu0 0.0
        %1297 = vmatprep.subr.mxu0 0.0
        %1298 = vmatpush1.xpose.msra.mxu0 0.0
        %1299 = vmatprep.subr.mxu0 0.0
        %1300 = vmatpush1.xpose.msra.mxu0 0.0
        %1301 = vmatprep.subr.mxu0 0.0
        %1302 = vmatpush1.xpose.msra.mxu0 0.0
        %1303 = vmatprep.subr.mxu0 0.0
        %1304 = vmatpush1.xpose.msra.mxu0 0.0
        %1305 = vmatprep.subr.mxu0 0.0
        %1306 = vmatpush1.xpose.msra.mxu0 0.0
        %1307 = vmatprep.subr.mxu0 0.0
        %1308 = vmatpush1.xpose.msra.mxu0 0.0
        %1309 = vmatprep.subr.mxu0 0.0
        %1310 = vmatpush1.xpose.msra.mxu0 0.0
        %1311 = vmatprep.mubr.f32.mxu0 0.0
        %v1312 = vand.u32 %v310, 4294901760
        %v1313 = vsub.f32 %v310, %v1312
        %1314 = vmatmul.mubr.f32.gmra.mrb[0].mxu0 %v1313
        %v1315 = vpop.f32.mrb[0].mxu0
        %v1316 = vadd.f32 %v1212, %v1315
        %v1317 = vpop.f32.mrb[0].mxu0
        %1318 = vdwg.mxu0
        %1319 = vmatprep.subr.mxu0 0.0
        %v1320 = vand.u32 %v311, 4294901760
        %1321 = vmatpush1.xpose.msra.mxu0 %v1320
        %1322 = vmatprep.subr.mxu0 0.0
        %v1323 = vand.u32 %v312, 4294901760
        %1324 = vmatpush1.xpose.msra.mxu0 %v1323
        %1325 = vmatprep.subr.mxu0 0.0
        %v1326 = vand.u32 %v313, 4294901760
        %1327 = vmatpush1.xpose.msra.mxu0 %v1326
        %1328 = vmatprep.subr.mxu0 0.0
        %v1329 = vand.u32 %v314, 4294901760
        %1330 = vmatpush1.xpose.msra.mxu0 %v1329
        %1331 = vmatprep.subr.mxu0 0.0
        %v1332 = vand.u32 %v315, 4294901760
        %1333 = vmatpush1.xpose.msra.mxu0 %v1332
        %1334 = vmatprep.subr.mxu0 0.0
        %v1335 = vand.u32 %v316, 4294901760
        %1336 = vmatpush1.xpose.msra.mxu0 %v1335
        %1337 = vmatprep.subr.mxu0 0.0
        %v1338 = vand.u32 %v317, 4294901760
        %1339 = vmatpush1.xpose.msra.mxu0 %v1338
        %1340 = vmatprep.subr.mxu0 0.0
        %v1341 = vand.u32 %v318, 4294901760
        %1342 = vmatpush1.xpose.msra.mxu0 %v1341
        %1343 = vmatprep.subr.mxu0 0.0
        %v1344 = vand.u32 %v319, 4294901760
        %1345 = vmatpush1.xpose.msra.mxu0 %v1344
        %1346 = vmatprep.subr.mxu0 0.0
        %v1347 = vand.u32 %v320, 4294901760
        %1348 = vmatpush1.xpose.msra.mxu0 %v1347
        %1349 = vmatprep.subr.mxu0 0.0
        %v1350 = vand.u32 %v321, 4294901760
        %1351 = vmatpush1.xpose.msra.mxu0 %v1350
        %1352 = vmatprep.subr.mxu0 0.0
        %v1353 = vand.u32 %v322, 4294901760
        %1354 = vmatpush1.xpose.msra.mxu0 %v1353
        %1355 = vmatprep.subr.mxu0 0.0
        %v1356 = vand.u32 %v323, 4294901760
        %1357 = vmatpush1.xpose.msra.mxu0 %v1356
        %1358 = vmatprep.subr.mxu0 0.0
        %v1359 = vand.u32 %v324, 4294901760
        %1360 = vmatpush1.xpose.msra.mxu0 %v1359
        %1361 = vmatprep.subr.mxu0 0.0
        %v1362 = vand.u32 %v325, 4294901760
        %1363 = vmatpush1.xpose.msra.mxu0 %v1362
        %1364 = vmatprep.subr.mxu0 0.0
        %v1365 = vand.u32 %v326, 4294901760
        %1366 = vmatpush1.xpose.msra.mxu0 %v1365
        %1367 = vmatprep.subr.mxu0 0.0
        %1368 = vmatpush1.xpose.msra.mxu0 0.0
        %1369 = vmatprep.subr.mxu0 0.0
        %1370 = vmatpush1.xpose.msra.mxu0 0.0
        %1371 = vmatprep.subr.mxu0 0.0
        %1372 = vmatpush1.xpose.msra.mxu0 0.0
        %1373 = vmatprep.subr.mxu0 0.0
        %1374 = vmatpush1.xpose.msra.mxu0 0.0
        %1375 = vmatprep.subr.mxu0 0.0
        %1376 = vmatpush1.xpose.msra.mxu0 0.0
        %1377 = vmatprep.subr.mxu0 0.0
        %1378 = vmatpush1.xpose.msra.mxu0 0.0
        %1379 = vmatprep.subr.mxu0 0.0
        %1380 = vmatpush1.xpose.msra.mxu0 0.0
        %1381 = vmatprep.subr.mxu0 0.0
        %1382 = vmatpush1.xpose.msra.mxu0 0.0
        %1383 = vmatprep.subr.mxu0 0.0
        %1384 = vmatpush1.xpose.msra.mxu0 0.0
        %1385 = vmatprep.subr.mxu0 0.0
        %1386 = vmatpush1.xpose.msra.mxu0 0.0
        %1387 = vmatprep.subr.mxu0 0.0
        %1388 = vmatpush1.xpose.msra.mxu0 0.0
        %1389 = vmatprep.subr.mxu0 0.0
        %1390 = vmatpush1.xpose.msra.mxu0 0.0
        %1391 = vmatprep.subr.mxu0 0.0
        %1392 = vmatpush1.xpose.msra.mxu0 0.0
        %1393 = vmatprep.subr.mxu0 0.0
        %1394 = vmatpush1.xpose.msra.mxu0 0.0
        %1395 = vmatprep.subr.mxu0 0.0
        %1396 = vmatpush1.xpose.msra.mxu0 0.0
        %1397 = vmatprep.subr.mxu0 0.0
        %1398 = vmatpush1.xpose.msra.mxu0 0.0
        %1399 = vmatprep.mubr.f32.mxu0 0.0
        %v1400 = vand.u32 %v310, 4294901760
        %v1401 = vsub.f32 %v310, %v1400
        %v1402 = vand.u32 %v1401, 4294901760
        %1403 = vmatmul.mubr.f32.gmra.mrb[0].mxu0 %v1402
        %v1404 = vpop.f32.mrb[0].mxu0
        %v1405 = vadd.f32 %v1316, %v1404
        %v1406 = vpop.f32.mrb[0].mxu0
        %1407 = vdwg.mxu0
        %1408 = vmatprep.subr.mxu0 0.0
        %v1409 = vand.u32 %v311, 4294901760
        %v1410 = vsub.f32 %v311, %v1409
        %v1411 = vand.u32 %v1410, 4294901760
        %1412 = vmatpush1.xpose.msra.mxu0 %v1411
        %1413 = vmatprep.subr.mxu0 0.0
        %v1414 = vand.u32 %v312, 4294901760
        %v1415 = vsub.f32 %v312, %v1414
        %v1416 = vand.u32 %v1415, 4294901760
        %1417 = vmatpush1.xpose.msra.mxu0 %v1416
        %1418 = vmatprep.subr.mxu0 0.0
        %v1419 = vand.u32 %v313, 4294901760
        %v1420 = vsub.f32 %v313, %v1419
        %v1421 = vand.u32 %v1420, 4294901760
        %1422 = vmatpush1.xpose.msra.mxu0 %v1421
        %1423 = vmatprep.subr.mxu0 0.0
        %v1424 = vand.u32 %v314, 4294901760
        %v1425 = vsub.f32 %v314, %v1424
        %v1426 = vand.u32 %v1425, 4294901760
        %1427 = vmatpush1.xpose.msra.mxu0 %v1426
        %1428 = vmatprep.subr.mxu0 0.0
        %v1429 = vand.u32 %v315, 4294901760
        %v1430 = vsub.f32 %v315, %v1429
        %v1431 = vand.u32 %v1430, 4294901760
        %1432 = vmatpush1.xpose.msra.mxu0 %v1431
        %1433 = vmatprep.subr.mxu0 0.0
        %v1434 = vand.u32 %v316, 4294901760
        %v1435 = vsub.f32 %v316, %v1434
        %v1436 = vand.u32 %v1435, 4294901760
        %1437 = vmatpush1.xpose.msra.mxu0 %v1436
        %1438 = vmatprep.subr.mxu0 0.0
        %v1439 = vand.u32 %v317, 4294901760
        %v1440 = vsub.f32 %v317, %v1439
        %v1441 = vand.u32 %v1440, 4294901760
        %1442 = vmatpush1.xpose.msra.mxu0 %v1441
        %1443 = vmatprep.subr.mxu0 0.0
        %v1444 = vand.u32 %v318, 4294901760
        %v1445 = vsub.f32 %v318, %v1444
        %v1446 = vand.u32 %v1445, 4294901760
        %1447 = vmatpush1.xpose.msra.mxu0 %v1446
        %1448 = vmatprep.subr.mxu0 0.0
        %v1449 = vand.u32 %v319, 4294901760
        %v1450 = vsub.f32 %v319, %v1449
        %v1451 = vand.u32 %v1450, 4294901760
        %1452 = vmatpush1.xpose.msra.mxu0 %v1451
        %1453 = vmatprep.subr.mxu0 0.0
        %v1454 = vand.u32 %v320, 4294901760
        %v1455 = vsub.f32 %v320, %v1454
        %v1456 = vand.u32 %v1455, 4294901760
        %1457 = vmatpush1.xpose.msra.mxu0 %v1456
        %1458 = vmatprep.subr.mxu0 0.0
        %v1459 = vand.u32 %v321, 4294901760
        %v1460 = vsub.f32 %v321, %v1459
        %v1461 = vand.u32 %v1460, 4294901760
        %1462 = vmatpush1.xpose.msra.mxu0 %v1461
        %1463 = vmatprep.subr.mxu0 0.0
        %v1464 = vand.u32 %v322, 4294901760
        %v1465 = vsub.f32 %v322, %v1464
        %v1466 = vand.u32 %v1465, 4294901760
        %1467 = vmatpush1.xpose.msra.mxu0 %v1466
        %1468 = vmatprep.subr.mxu0 0.0
        %v1469 = vand.u32 %v323, 4294901760
        %v1470 = vsub.f32 %v323, %v1469
        %v1471 = vand.u32 %v1470, 4294901760
        %1472 = vmatpush1.xpose.msra.mxu0 %v1471
        %1473 = vmatprep.subr.mxu0 0.0
        %v1474 = vand.u32 %v324, 4294901760
        %v1475 = vsub.f32 %v324, %v1474
        %v1476 = vand.u32 %v1475, 4294901760
        %1477 = vmatpush1.xpose.msra.mxu0 %v1476
        %1478 = vmatprep.subr.mxu0 0.0
        %v1479 = vand.u32 %v325, 4294901760
        %v1480 = vsub.f32 %v325, %v1479
        %v1481 = vand.u32 %v1480, 4294901760
        %1482 = vmatpush1.xpose.msra.mxu0 %v1481
        %1483 = vmatprep.subr.mxu0 0.0
        %v1484 = vand.u32 %v326, 4294901760
        %v1485 = vsub.f32 %v326, %v1484
        %v1486 = vand.u32 %v1485, 4294901760
        %1487 = vmatpush1.xpose.msra.mxu0 %v1486
        %1488 = vmatprep.subr.mxu0 0.0
        %1489 = vmatpush1.xpose.msra.mxu0 0.0
        %1490 = vmatprep.subr.mxu0 0.0
        %1491 = vmatpush1.xpose.msra.mxu0 0.0
        %1492 = vmatprep.subr.mxu0 0.0
        %1493 = vmatpush1.xpose.msra.mxu0 0.0
        %1494 = vmatprep.subr.mxu0 0.0
        %1495 = vmatpush1.xpose.msra.mxu0 0.0
        %1496 = vmatprep.subr.mxu0 0.0
        %1497 = vmatpush1.xpose.msra.mxu0 0.0
        %1498 = vmatprep.subr.mxu0 0.0
        %1499 = vmatpush1.xpose.msra.mxu0 0.0
        %1500 = vmatprep.subr.mxu0 0.0
        %1501 = vmatpush1.xpose.msra.mxu0 0.0
        %1502 = vmatprep.subr.mxu0 0.0
        %1503 = vmatpush1.xpose.msra.mxu0 0.0
        %1504 = vmatprep.subr.mxu0 0.0
        %1505 = vmatpush1.xpose.msra.mxu0 0.0
        %1506 = vmatprep.subr.mxu0 0.0
        %1507 = vmatpush1.xpose.msra.mxu0 0.0
        %1508 = vmatprep.subr.mxu0 0.0
        %1509 = vmatpush1.xpose.msra.mxu0 0.0
        %1510 = vmatprep.subr.mxu0 0.0
        %1511 = vmatpush1.xpose.msra.mxu0 0.0
        %1512 = vmatprep.subr.mxu0 0.0
        %1513 = vmatpush1.xpose.msra.mxu0 0.0
        %1514 = vmatprep.subr.mxu0 0.0
        %1515 = vmatpush1.xpose.msra.mxu0 0.0
        %1516 = vmatprep.subr.mxu0 0.0
        %1517 = vmatpush1.xpose.msra.mxu0 0.0
        %1518 = vmatprep.subr.mxu0 0.0
        %1519 = vmatpush1.xpose.msra.mxu0 0.0
        %1520 = vmatprep.mubr.f32.mxu0 0.0
        %v1521 = vand.u32 %v310, 4294901760
        %1522 = vmatmul.mubr.f32.gmra.mrb[0].mxu0 %v1521
        %v1523 = vpop.f32.mrb[0].mxu0
        %v1524 = vadd.f32 %v1405, %v1523
        %v1525 = vpop.f32.mrb[0].mxu0
        %1526 = vdwg.mxu0
        %1527 = vmatprep.subr.mxu0 0.0
        %v1528 = vand.u32 %v311, 4294901760
        %1529 = vmatpush1.xpose.msra.mxu0 %v1528
        %1530 = vmatprep.subr.mxu0 0.0
        %v1531 = vand.u32 %v312, 4294901760
        %1532 = vmatpush1.xpose.msra.mxu0 %v1531
        %1533 = vmatprep.subr.mxu0 0.0
        %v1534 = vand.u32 %v313, 4294901760
        %1535 = vmatpush1.xpose.msra.mxu0 %v1534
        %1536 = vmatprep.subr.mxu0 0.0
        %v1537 = vand.u32 %v314, 4294901760
        %1538 = vmatpush1.xpose.msra.mxu0 %v1537
        %1539 = vmatprep.subr.mxu0 0.0
        %v1540 = vand.u32 %v315, 4294901760
        %1541 = vmatpush1.xpose.msra.mxu0 %v1540
        %1542 = vmatprep.subr.mxu0 0.0
        %v1543 = vand.u32 %v316, 4294901760
        %1544 = vmatpush1.xpose.msra.mxu0 %v1543
        %1545 = vmatprep.subr.mxu0 0.0
        %v1546 = vand.u32 %v317, 4294901760
        %1547 = vmatpush1.xpose.msra.mxu0 %v1546
        %1548 = vmatprep.subr.mxu0 0.0
        %v1549 = vand.u32 %v318, 4294901760
        %1550 = vmatpush1.xpose.msra.mxu0 %v1549
        %1551 = vmatprep.subr.mxu0 0.0
        %v1552 = vand.u32 %v319, 4294901760
        %1553 = vmatpush1.xpose.msra.mxu0 %v1552
        %1554 = vmatprep.subr.mxu0 0.0
        %v1555 = vand.u32 %v320, 4294901760
        %1556 = vmatpush1.xpose.msra.mxu0 %v1555
        %1557 = vmatprep.subr.mxu0 0.0
        %v1558 = vand.u32 %v321, 4294901760
        %1559 = vmatpush1.xpose.msra.mxu0 %v1558
        %1560 = vmatprep.subr.mxu0 0.0
        %v1561 = vand.u32 %v322, 4294901760
        %1562 = vmatpush1.xpose.msra.mxu0 %v1561
        %1563 = vmatprep.subr.mxu0 0.0
        %v1564 = vand.u32 %v323, 4294901760
        %1565 = vmatpush1.xpose.msra.mxu0 %v1564
        %1566 = vmatprep.subr.mxu0 0.0
        %v1567 = vand.u32 %v324, 4294901760
        %1568 = vmatpush1.xpose.msra.mxu0 %v1567
        %1569 = vmatprep.subr.mxu0 0.0
        %v1570 = vand.u32 %v325, 4294901760
        %1571 = vmatpush1.xpose.msra.mxu0 %v1570
        %1572 = vmatprep.subr.mxu0 0.0
        %v1573 = vand.u32 %v326, 4294901760
        %1574 = vmatpush1.xpose.msra.mxu0 %v1573
        %1575 = vmatprep.subr.mxu0 0.0
        %1576 = vmatpush1.xpose.msra.mxu0 0.0
        %1577 = vmatprep.subr.mxu0 0.0
        %1578 = vmatpush1.xpose.msra.mxu0 0.0
        %1579 = vmatprep.subr.mxu0 0.0
        %1580 = vmatpush1.xpose.msra.mxu0 0.0
        %1581 = vmatprep.subr.mxu0 0.0
        %1582 = vmatpush1.xpose.msra.mxu0 0.0
        %1583 = vmatprep.subr.mxu0 0.0
        %1584 = vmatpush1.xpose.msra.mxu0 0.0
        %1585 = vmatprep.subr.mxu0 0.0
        %1586 = vmatpush1.xpose.msra.mxu0 0.0
        %1587 = vmatprep.subr.mxu0 0.0
        %1588 = vmatpush1.xpose.msra.mxu0 0.0
        %1589 = vmatprep.subr.mxu0 0.0
        %1590 = vmatpush1.xpose.msra.mxu0 0.0
        %1591 = vmatprep.subr.mxu0 0.0
        %1592 = vmatpush1.xpose.msra.mxu0 0.0
        %1593 = vmatprep.subr.mxu0 0.0
        %1594 = vmatpush1.xpose.msra.mxu0 0.0
        %1595 = vmatprep.subr.mxu0 0.0
        %1596 = vmatpush1.xpose.msra.mxu0 0.0
        %1597 = vmatprep.subr.mxu0 0.0
        %1598 = vmatpush1.xpose.msra.mxu0 0.0
        %1599 = vmatprep.subr.mxu0 0.0
        %1600 = vmatpush1.xpose.msra.mxu0 0.0
        %1601 = vmatprep.subr.mxu0 0.0
        %1602 = vmatpush1.xpose.msra.mxu0 0.0
        %1603 = vmatprep.subr.mxu0 0.0
        %1604 = vmatpush1.xpose.msra.mxu0 0.0
        %1605 = vmatprep.subr.mxu0 0.0
        %1606 = vmatpush1.xpose.msra.mxu0 0.0
        %1607 = vmatprep.mubr.f32.mxu0 0.0
        %v1608 = vand.u32 %v310, 4294901760
        %1609 = vmatmul.mubr.f32.gmra.mrb[0].mxu0 %v1608
        %v1610 = vpop.f32.mrb[0].mxu0
        %v1611 = vadd.f32 %v1524, %v1610
        %v1612 = vpop.f32.mrb[0].mxu0
        %1613 = vdwg.mxu0
        %v1614 = vlaneseq
        %v1615 = vshrl.u32 %v1614, 7
        %v1616 = vsub.s32 0, %v1615
        %v1617 = vrot.slane %v972, %v1616
        %v1618 = vmul.f32 %v1611, %v1617
        %1619 = vst [vmem:[%s267] sm:$0xff] %v1618
        %s1620 = sadd.s32 %s302, 1
        %s1621 = smul.u32 %s1620, 128
        %p1622 = scmp.le.s32.totalorder %s1621, 320
        // Predicated region
        $region41: #{tpu_custom_call.1} parent=27 // pred_check
          %p1623 = pneg %p1622
        $region42: #{tpu_custom_call.1} parent=27 // pred_check_branch
          %1625 = sbr.rel (%p1623) target = $region44
        $region43: #{tpu_custom_call.1} parent=27 // pred_region
          %v1626 = vld [vmem:[%s296] sm:$0xff]
          %1627 = vmax.xlane.f32.xlu0 %v1618
          %v1628 = vpop.xlane.xlu0 %1627
          %v1629 = vmax.f32 %v1626, %v1628
          %v1630 = vsub.f32 %v1626, %v1629
          %v1631 = vmul.f32 %v1630, 1.442695
          %v1632 = vpow.pop %v1631
          %v1633 = vld [vmem:[%s300] sm:$0xff]
          %v1634 = vmul.f32 %v1632, %v1633
          %1636 = vset.pattern.permute.xlu0 0
          %1637 = vperm.xlu0 %1636, %v1629
          %v1638 = vpop.permute.xlu0 %1637
          %v1640 = vsub.f32 %v1618, %v1638
          %v1641 = vmul.f32 %v1640, 1.442695
          %v1642 = vpow.pop %v1641
          %1643 = vadd.xlane.f32.xlu0 %v1642
          %v1644 = vpop.xlane.xlu0 %1643
          %v1645 = vadd.f32 %v1634, %v1644
          %vm1646 = vcmask 7168
          %1647 = vst.msk [vmem:[%s300] sm:$0xff] %vm1646, %v1645
          %1648 = vst.msk [vmem:[%s296] sm:$0xff] %vm1646, %v1629
        $region44: #{tpu_custom_call.1} parent=27 // pred_fallthru
          _
        %p1649 = scmp.gt.s32.totalorder %s1621, 320
        // Predicated region
        $region45: #{tpu_custom_call.1} parent=27 // pred_check
          %p1650 = pneg %p1649
        $region46: #{tpu_custom_call.1} parent=27 // pred_check_branch
          %1652 = sbr.rel (%p1650) target = $region48
        $region47: #{tpu_custom_call.1} parent=27 // pred_region
          %v1653 = vlaneseq
          %v1654 = vand.u32 %v1653, 127
          %s1655 = smul.u32 %s302, 128
          %v1656 = vstv %s1655
          %v1657 = vadd.s32 %v1654, %v1656
          %vm1658 = vcmp.lt.s32.totalorder %v1657, 320
          %v1659 = vsel %vm1658, %v1618, -inf
          %v1660 = vld [vmem:[%s296] sm:$0xff]
          %1661 = vmax.xlane.f32.xlu0 %v1659
          %v1662 = vpop.xlane.xlu0 %1661
          %v1663 = vmax.f32 %v1660, %v1662
          %v1664 = vsub.f32 %v1660, %v1663
          %v1665 = vmul.f32 %v1664, 1.442695
          %v1666 = vpow.pop %v1665
          %v1667 = vld [vmem:[%s300] sm:$0xff]
          %v1668 = vmul.f32 %v1666, %v1667
          %1670 = vset.pattern.permute.xlu0 0
          %1671 = vperm.xlu0 %1670, %v1663
          %v1672 = vpop.permute.xlu0 %1671
          %v1674 = vsub.f32 %v1659, %v1672
          %v1675 = vmul.f32 %v1674, 1.442695
          %v1676 = vpow.pop %v1675
          %1677 = vadd.xlane.f32.xlu0 %v1676
          %v1678 = vpop.xlane.xlu0 %1677
          %v1679 = vadd.f32 %v1668, %v1678
          %vm1680 = vcmask 7168
          %1681 = vst.msk [vmem:[%s300] sm:$0xff] %vm1680, %v1679
          %1682 = vst.msk [vmem:[%s296] sm:$0xff] %vm1680, %v1663
        $region48: #{tpu_custom_call.1} parent=27 // pred_fallthru
          _
        %s1683 = sand.u32 %s106, 1
        %s1684 = scalar_lea.sflag [#allocation4], %s1683
        %s1685 = sand.u32 %s106, 1
        %s1686 = smul.addr %s1685, 8
        %s1687 = scalar_lea.vmem [#allocation7], %s1686
        %p1688 = scmp.lt.s32.totalorder %s27, 1
        %s1689 = scalar_select %p1688, %s27, 1
        %s1690 = smul.addr %s1689, 8
        %s1691 = scalar_lea.vmem %s3, %s1690
        %p1692 = scmp.lt.s32.totalorder %s27, 1
        %s1693 = scalar_select %p1692, %s27, 1
        %s1694 = smul.addr %s1693, 8
        %s1695 = scalar_lea.vmem %s4, %s1694
        // Predicated region
        $region49: #{tpu_custom_call.1} parent=27 // pred_check
          %p1696 = pneg %p116
        $region50: #{tpu_custom_call.1} parent=27 // pred_check_branch
          %1698 = sbr.rel (%p1696) target = $region52
        $region51: #{tpu_custom_call.1} parent=27 // pred_region
          %s1699 = smul.u32 %s27, 2
          %s1700 = sadd.s32 %s1699, %s28
          %p1701 = scmp.lt.s32.totalorder %s1700, 2
          %s1702 = scalar_select %p1701, %s1700, 2
          %s1704 = ssub.s32 128, 128
          %1705 = vsyncadd %s1684, %s1704
          %s1706 = smul.addr %s1702, 128
          %s1707 = scalar_lea.hbm %s2, %s1706
          %s1709 = sshll.u32 %s1687, 4
          %s1710 = int_to_ptr.vmem [resolvable:$true] %s1709
          %1712 = dma.vmem_to_hbm [thread:$0]  %s1710, 128, %s1707, %s1684
        $region52: #{tpu_custom_call.1} parent=27 // pred_fallthru
          _
        // Predicated region
        $region53: #{tpu_custom_call.1} parent=27 // pred_check
          %p1713 = pneg %p142
        $region54: #{tpu_custom_call.1} parent=27 // pred_check_branch
          %1715 = sbr.rel (%p1713) target = $region56
        $region55: #{tpu_custom_call.1} parent=27 // pred_region
          _
        $region56: #{tpu_custom_call.1} parent=27 // pred_fallthru
          _
        // Predicated region
        $region57: #{tpu_custom_call.1} parent=27 // pred_check
          %p1716 = pneg %p168
        $region58: #{tpu_custom_call.1} parent=27 // pred_check_branch
          %1718 = sbr.rel (%p1716) target = $region60
        $region59: #{tpu_custom_call.1} parent=27 // pred_region
          _
        $region60: #{tpu_custom_call.1} parent=27 // pred_fallthru
          _
      $region28: #{tpu_custom_call.1} parent=5 // pred_fallthru
        _
      %p1719 = scmp.le.s32.totalorder 2, %s18
      // Predicated region
      $region61: #{tpu_custom_call.1} parent=5 // pred_check
        %p1720 = pneg %p1719
      $region62: #{tpu_custom_call.1} parent=5 // pred_check_branch
        %1722 = sbr.rel (%p1720) target = $region64
      $region63: #{tpu_custom_call.1} parent=5 // pred_region
        %s1723 = ssub.s32 %s18, 2
        // Predicated region
        $region65: #{tpu_custom_call.1} parent=63 // pred_check
          %p1724 = pneg %p122
        $region66: #{tpu_custom_call.1} parent=63 // pred_check_branch
          %1726 = sbr.rel (%p1724) target = $region68
        $region67: #{tpu_custom_call.1} parent=63 // pred_region
          %s1727 = sand.u32 %s107, 1
          %s1728 = scalar_lea.sflag [#allocation4], %s1727
          %s1729 = sand.u32 %s107, 1
          %s1730 = smul.addr %s1729, 8
          %s1731 = scalar_lea.vmem [#allocation7], %s1730
          %1732 = dma.done %s1728, 128
        $region68: #{tpu_custom_call.1} parent=63 // pred_fallthru
          _
        // Predicated region
        $region69: #{tpu_custom_call.1} parent=63 // pred_check
          %p1733 = pneg %p148
        $region70: #{tpu_custom_call.1} parent=63 // pred_check_branch
          %1735 = sbr.rel (%p1733) target = $region72
        $region71: #{tpu_custom_call.1} parent=63 // pred_region
          %p1736 = scmp.lt.s32.totalorder %s29, 1
          %s1737 = scalar_select %p1736, %s29, 1
          %s1738 = smul.addr %s1737, 8
          %s1739 = scalar_lea.vmem %s3, %s1738
        $region72: #{tpu_custom_call.1} parent=63 // pred_fallthru
          _
        // Predicated region
        $region73: #{tpu_custom_call.1} parent=63 // pred_check
          %p1740 = pneg %p174
        $region74: #{tpu_custom_call.1} parent=63 // pred_check_branch
          %1742 = sbr.rel (%p1740) target = $region76
        $region75: #{tpu_custom_call.1} parent=63 // pred_region
          %p1743 = scmp.lt.s32.totalorder %s29, 1
          %s1744 = scalar_select %p1743, %s29, 1
          %s1745 = smul.addr %s1744, 8
          %s1746 = scalar_lea.vmem %s4, %s1745
        $region76: #{tpu_custom_call.1} parent=63 // pred_fallthru
          _
      $region64: #{tpu_custom_call.1} parent=5 // pred_fallthru
        _
    $region6: #{tpu_custom_call.1} parent=1 // loop_footer
      %s22 = sadd.s32 1, %s18
    $region7: #{tpu_custom_call.1} parent=1 // loop_footer_branch
      %17 = sbr.rel target = $region3
    $region8: #{tpu_custom_call.1} parent=1 // loop_exit
      _
    %1747 = vsyncpa [#allocation3], 1
    %s1748 = scalar_lea.sflag [#allocation3], 1
    %1749 = vsyncpa %s1748, 1
    %1750 = vsyncpa [#allocation6], 1
    %s1751 = scalar_lea.sflag [#allocation6], 1
    %1752 = vsyncpa %s1751, 1
    %1753 = vsyncpa [#allocation4], 1
    %s1754 = scalar_lea.sflag [#allocation4], 1
    %1755 = vsyncpa %s1754, 1

</llo_original>
